<compile_context>
chip_gen: v7x
topology: tpu7x:2x2x1
jax: 0.10.0
libtpu: 0.0.40
codegen_flags: <defaults>
</compile_context>

<pallas_src>
import jax
import jax.numpy as jnp
from jax.experimental import pallas as pl
from jax.experimental.pallas import tpu as pltpu

L = 128                 # lane width: every feature dim is zero-padded to this
G = 3 * L               # GRU gate-padded width (gate g occupies lanes [g*L, g*L + H))

# --- packed state-slab row offsets (static) ---
S_ENC = 0 * L           # encoder outputs (S,H) zero-padded to (L,L)
S_ENCT = 1 * L          # encoder outputs transposed (H,S); row H = ones (b_attn fold)
S_VEC = 2 * L           # row S_VEC: last_context ; row S_VEC+1: previous hidden
SS_ROWS = 2 * L + 8     # 264

WG_ROWS = 2 * L + 8     # W_ihc^T ; W_hh^T ; b_hh row
WO_ROWS = 2 * L + 8     # W_out_h^T ; W_out_ctx^T ; b_out row


def pack_params(params):
    """One-time packing: pre-transpose / pad / pre-compose weights into lane-dense slabs."""
    emb = params["embedding"]                            # (V, E)
    V, E = emb.shape
    H = params["w_hh"].shape[1]
    assert H < L and V <= L, "config exceeds single-tile packing"
    w_ih, w_hh = params["w_ih"], params["w_hh"]

    # per-vocab input-gate table: gix[v] = emb[v] @ W_ih_x^T + b_ih   (gate-padded)
    gix = jnp.zeros((L, G), jnp.float32)
    # recurrent GRU weights: rows 0:L = W_ihc^T, rows L:2L = W_hh^T, row 2L = b_hh
    w_gru = jnp.zeros((WG_ROWS, G), jnp.float32)
    for g in range(3):                                   # PyTorch gate order (r, z, n)
        wig = w_ih[g * H:(g + 1) * H, :]                 # (H, E+H)
        gix = gix.at[:V, g * L:g * L + H].set(
            emb @ wig[:, :E].T + params["b_ih"][g * H:(g + 1) * H][None, :])
        w_gru = w_gru.at[0:H, g * L:g * L + H].set(wig[:, E:].T)
        w_gru = w_gru.at[L:L + H, g * L:g * L + H].set(w_hh[g * H:(g + 1) * H, :].T)
        w_gru = w_gru.at[2 * L, g * L:g * L + H].set(params["b_hh"][g * H:(g + 1) * H])

    # attention: energies = (h @ W_attn) @ enc^T + h.b_attn ; b_attn rides the MXU as column H
    w_attn_blk = jnp.zeros((L, L), jnp.float32)
    w_attn_blk = w_attn_blk.at[:H, :H].set(params["w_attn"])
    w_attn_blk = w_attn_blk.at[:H, H].set(params["b_attn"])

    # output head: logits = [h | ctx] @ [W_out_h^T ; W_out_ctx^T] + b_out  (batched over T)
    w_out_blk = jnp.zeros((WO_ROWS, L), jnp.float32)
    w_out_blk = w_out_blk.at[0:H, :V].set(params["w_out"][:, :H].T)
    w_out_blk = w_out_blk.at[L:L + H, :V].set(params["w_out"][:, H:].T)
    w_out_blk = w_out_blk.at[2 * L, :V].set(params["b_out"])

    return {"gix": gix, "w_gru": w_gru, "w_attn": w_attn_blk, "w_out": w_out_blk,
            "dims": (H, E, V)}


def _pack_state(last_context, last_hidden, encoder_outputs, H):
    """Per-call dynamic state packed into one lane-dense slab (one DMA)."""
    enc = encoder_outputs[:, 0, :].astype(jnp.float32)   # (S, H), batch = 1
    S = enc.shape[0]
    assert S <= L
    ss = jnp.zeros((SS_ROWS, L), jnp.float32)
    ss = ss.at[S_ENC:S_ENC + S, :H].set(enc)
    ss = ss.at[S_ENCT:S_ENCT + H, :S].set(enc.T)
    ss = ss.at[S_ENCT + H, :S].set(1.0)                  # ones row -> b_attn term from the MXU
    ss = ss.at[S_VEC, :H].set(last_context[0].astype(jnp.float32))
    ss = ss.at[S_VEC + 1, :H].set(last_hidden[0, 0].astype(jnp.float32))
    return ss, S


def _make_kernel(T, Tp, S, V):
    """Single-invocation kernel: full T-step decode with the recurrence carried in vregs."""

    def kernel(tok_ref, gix_ref, wg_ref, wa_ref, wo_ref, ss_ref,
               logp_ref, h_ref, ctx_ref, aw_ref, hc_ref):
        lane = jax.lax.broadcasted_iota(jnp.int32, (1, L), 1)

        hc_ref[...] = jnp.zeros((Tp, 2 * L), jnp.float32)       # [h | ctx] stash for the output head

        ctx = ss_ref[S_VEC:S_VEC + 1, :]                        # (1, L) initial context
        h = ss_ref[S_VEC + 1:S_VEC + 2, :]                      # (1, L) initial hidden
        b_hh = wg_ref[2 * L:2 * L + 1, :]                       # (1, G)

        for t in range(T):                                      # fully unrolled (T is small, static)
            # --- GRU cell; gates lane-aligned at 0 / L / 2L.  The embedded-word contribution
            #     (emb @ W_ihx + b_ih) was pre-composed at pack time -> one dynamic row load.
            gi = (gix_ref[pl.ds(tok_ref[t], 1), :]
                  + jnp.dot(ctx, wg_ref[0:L, :], preferred_element_type=jnp.float32))
            gh = jnp.dot(h, wg_ref[L:2 * L, :], preferred_element_type=jnp.float32) + b_hh
            r = jax.nn.sigmoid(gi[:, 0:L] + gh[:, 0:L])
            z = jax.nn.sigmoid(gi[:, L:2 * L] + gh[:, L:2 * L])
            n = jnp.tanh(gi[:, 2 * L:3 * L] + r * gh[:, 2 * L:3 * L])
            h = (1.0 - z) * n + z * h                           # padded lanes stay exactly 0

            # --- attention, method='general' (transpose-free; b_attn folded into the matmuls)
            q = jnp.dot(h, wa_ref[...], preferred_element_type=jnp.float32)          # (1, L)
            energies = jnp.dot(q, ss_ref[S_ENCT:S_ENCT + L, :],
                               preferred_element_type=jnp.float32)                   # (1, L)
            energies = jnp.where(lane < S, energies, -1e30)
            aw = jax.nn.softmax(energies, axis=-1)
            ctx = jnp.dot(aw, ss_ref[S_ENC:S_ENC + L, :],
                          preferred_element_type=jnp.float32)                        # (1, L)

            hc_ref[t:t + 1, 0:L] = h
            hc_ref[t:t + 1, L:2 * L] = ctx
            aw_ref[t:t + 1, :] = aw

        if T < Tp:
            aw_ref[T:Tp, :] = jnp.zeros((Tp - T, L), jnp.float32)

        # --- batched output head + log-softmax, once for all steps (off the serial chain) ---
        hc = hc_ref[...]                                                              # (Tp, 2L)
        logits = (jnp.dot(hc, wo_ref[0:2 * L, :], preferred_element_type=jnp.float32)
                  + wo_ref[2 * L:2 * L + 1, :])                                       # (Tp, L)
        if V < L:
            logits = jnp.where(lane < V, logits, -1e30)
        logp = jax.nn.log_softmax(logits, axis=-1)

        logp_ref[...] = logp
        h_ref[...] = hc[:, 0:L]
        ctx_ref[...] = hc[:, L:2 * L]

    return kernel


def attn_decoder_decode(packed, token_ids, last_context, last_hidden, encoder_outputs):
    """Fused teacher-forced decode of T steps in ONE single-step pallas_call."""
    H, _, V = packed["dims"]
    ss, S = _pack_state(last_context, last_hidden, encoder_outputs, H)
    T = int(token_ids.shape[0])
    Tp = ((T + 7) // 8) * 8

    grid_spec = pltpu.PrefetchScalarGridSpec(
        num_scalar_prefetch=1,                                   # token ids -> SMEM
        grid=(1,),
        in_specs=[
            pl.BlockSpec((L, G), lambda i, tok: (0, 0)),         # per-vocab gi_x table
            pl.BlockSpec((WG_ROWS, G), lambda i, tok: (0, 0)),   # [W_ihc^T ; W_hh^T ; b_hh]
            pl.BlockSpec((L, L), lambda i, tok: (0, 0)),         # W_attn (+ b_attn column)
            pl.BlockSpec((WO_ROWS, L), lambda i, tok: (0, 0)),   # [W_out_h^T ; W_out_ctx^T ; b_out]
            pl.BlockSpec((SS_ROWS, L), lambda i, tok: (0, 0)),   # enc / enc^T (+ones) / init state
        ],
        out_specs=[
            pl.BlockSpec((Tp, L), lambda i, tok: (0, 0)),        # log-probs
            pl.BlockSpec((Tp, L), lambda i, tok: (0, 0)),        # hidden
            pl.BlockSpec((Tp, L), lambda i, tok: (0, 0)),        # context
            pl.BlockSpec((Tp, L), lambda i, tok: (0, 0)),        # attention weights
        ],
        scratch_shapes=[pltpu.VMEM((Tp, 2 * L), jnp.float32)],   # [h | ctx] per-step stash
    )
    out_shapes = tuple(jax.ShapeDtypeStruct((Tp, L), jnp.float32) for _ in range(4))

    logp, h_all, ctx_all, aw_all = pl.pallas_call(
        _make_kernel(T, Tp, S, V),
        out_shape=out_shapes,
        grid_spec=grid_spec,
        compiler_params=pltpu.CompilerParams(dimension_semantics=("arbitrary",)),
    )(token_ids.astype(jnp.int32), packed["gix"], packed["w_gru"],
      packed["w_attn"], packed["w_out"], ss)

    return logp[:T, :V], ctx_all[:T, :H], h_all[:T, :H], aw_all[:T, :S]


def attn_decoder_forward(packed, word_input, last_context, last_hidden, encoder_outputs):
    """Single decode step, matching AttnDecoderRNN.forward (batch=1, n_layers=1)."""
    H, _, _ = packed["dims"]
    S = encoder_outputs.shape[0]
    logp, ctx, h, aw = attn_decoder_decode(
        packed, word_input.reshape(1), last_context, last_hidden, encoder_outputs)
    # PyTorch shapes: output (1,V), context (1,H), hidden (1,1,H), attn_weights (1,1,S)
    return logp, ctx, h.reshape(1, 1, H), aw.reshape(1, 1, S)


def _reference_forward(params, word_input, last_context, last_hidden, encoder_outputs):
    """Pure-JAX reference with the module's exact math (for correctness check)."""
    H = last_hidden.shape[-1]
    x_emb = params["embedding"][word_input[0]][None, :]
    x = jnp.concatenate([x_emb, last_context], axis=1)
    h = last_hidden[0]
    gi = x @ params["w_ih"].T + params["b_ih"]
    gh = h @ params["w_hh"].T + params["b_hh"]
    r = jax.nn.sigmoid(gi[:, :H] + gh[:, :H])
    z = jax.nn.sigmoid(gi[:, H:2 * H] + gh[:, H:2 * H])
    n = jnp.tanh(gi[:, 2 * H:] + r * gh[:, 2 * H:])
    h_new = (1.0 - z) * n + z * h
    enc = encoder_outputs[:, 0, :]
    enc_proj = enc @ params["w_attn"].T + params["b_attn"]
    energies = h_new @ enc_proj.T
    aw = jax.nn.softmax(energies, axis=-1)
    context = aw @ enc
    logits = jnp.concatenate([h_new, context], axis=1) @ params["w_out"].T + params["b_out"]
    return jax.nn.log_softmax(logits, axis=-1), context, h_new[None], aw[None]


if __name__ == "__main__":
    H, E, V, S = 32, 32, 128, 8          # hidden_dim, output_dim, n_dict, seq_len
    key = jax.random.PRNGKey(0)
    ks = jax.random.split(key, 13)
    sc = 0.1
    params = {
        "embedding": jax.random.normal(ks[0], (V, E), jnp.float32) * sc,
        "w_ih": jax.random.normal(ks[1], (3 * H, E + H), jnp.float32) * sc,
        "w_hh": jax.random.normal(ks[2], (3 * H, H), jnp.float32) * sc,
        "b_ih": jax.random.normal(ks[3], (3 * H,), jnp.float32) * sc,
        "b_hh": jax.random.normal(ks[4], (3 * H,), jnp.float32) * sc,
        "w_attn": jax.random.normal(ks[5], (H, H), jnp.float32) * sc,
        "b_attn": jax.random.normal(ks[6], (H,), jnp.float32) * sc,
        "w_out": jax.random.normal(ks[7], (V, 2 * H), jnp.float32) * sc,
        "b_out": jax.random.normal(ks[8], (V,), jnp.float32) * sc,
    }
    packed = pack_params(params)                                     # one-time packing

    word_input = jnp.array([3], dtype=jnp.int32)
    last_context = jax.random.normal(ks[9], (1, H), jnp.float32)
    last_hidden = jax.random.normal(ks[10], (1, 1, H), jnp.float32)  # (n_layers=1, 1, H)
    encoder_outputs = jax.random.normal(ks[11], (S, 1, H), jnp.float32)

    # --- single decode step (module-equivalent forward) ---
    outs = jax.block_until_ready(
        attn_decoder_forward(packed, word_input, last_context, last_hidden, encoder_outputs))
    refs = _reference_forward(params, word_input, last_context, last_hidden, encoder_outputs)
    for got, ref in zip(outs, refs):
        assert got.shape == ref.shape, (got.shape, ref.shape)
        assert jnp.allclose(got, ref, atol=5e-5, rtol=5e-5), float(jnp.max(jnp.abs(got - ref)))

    # --- fused multi-step decode (teacher-forced token ids), one pallas_call ---
    token_ids = jnp.array([3, 17, 42, 99, 7], dtype=jnp.int32)
    T = int(token_ids.shape[0])
    logp, ctx_all, h_all, aw_all = jax.block_until_ready(
        attn_decoder_decode(packed, token_ids, last_context, last_hidden, encoder_outputs))
    ctx_r, hid_r = last_context, last_hidden
    for t in range(T):
        o_r, ctx_r, hid_r, aw_r = _reference_forward(
            params, token_ids[t:t + 1], ctx_r, hid_r, encoder_outputs)
        assert jnp.allclose(logp[t], o_r[0], atol=5e-5, rtol=5e-5)
        assert jnp.allclose(ctx_all[t], ctx_r[0], atol=5e-5, rtol=5e-5)
        assert jnp.allclose(h_all[t], hid_r[0, 0], atol=5e-5, rtol=5e-5)
        assert jnp.allclose(aw_all[t], aw_r[0, 0], atol=5e-5, rtol=5e-5)

    print("KERNEL_OK")
</pallas_src>

<mosaic_0001>
module attributes {stable_mosaic.version = 11 : i64} {
  func.func @kernel(%arg0: i32, %arg1: memref<1xi32, #tpu.memory_space<smem>>, %arg2: memref<128x384xf32, #tpu.memory_space<vmem>>, %arg3: memref<264x384xf32, #tpu.memory_space<vmem>>, %arg4: memref<128x128xf32, #tpu.memory_space<vmem>>, %arg5: memref<264x128xf32, #tpu.memory_space<vmem>>, %arg6: memref<264x128xf32, #tpu.memory_space<vmem>>, %arg7: memref<8x128xf32, #tpu.memory_space<vmem>>, %arg8: memref<8x128xf32, #tpu.memory_space<vmem>>, %arg9: memref<8x128xf32, #tpu.memory_space<vmem>>, %arg10: memref<8x128xf32, #tpu.memory_space<vmem>>, %arg11: memref<8x256xf32, #tpu.memory_space<vmem>>) attributes {dimension_semantics = [#tpu.dimension_semantics<arbitrary>], iteration_bounds = array<i64: 1>, scalar_prefetch = 1 : i64, scratch_operands = 1 : i64, tpu.core_type = #tpu.core_type<tc>, window_params = [{pipeline_mode = #tpu.pipeline_mode<synchronous>, transform_indices = @transform_0, window_bounds = array<i64: 128, 384>}, {pipeline_mode = #tpu.pipeline_mode<synchronous>, transform_indices = @transform_1, window_bounds = array<i64: 264, 384>}, {pipeline_mode = #tpu.pipeline_mode<synchronous>, transform_indices = @transform_2, window_bounds = array<i64: 128, 128>}, {pipeline_mode = #tpu.pipeline_mode<synchronous>, transform_indices = @transform_3, window_bounds = array<i64: 264, 128>}, {pipeline_mode = #tpu.pipeline_mode<synchronous>, transform_indices = @transform_4, window_bounds = array<i64: 264, 128>}, {pipeline_mode = #tpu.pipeline_mode<synchronous>, transform_indices = @transform_5, window_bounds = array<i64: 8, 128>}, {pipeline_mode = #tpu.pipeline_mode<synchronous>, transform_indices = @transform_6, window_bounds = array<i64: 8, 128>}, {pipeline_mode = #tpu.pipeline_mode<synchronous>, transform_indices = @transform_7, window_bounds = array<i64: 8, 128>}, {pipeline_mode = #tpu.pipeline_mode<synchronous>, transform_indices = @transform_8, window_bounds = array<i64: 8, 128>}]} {
    %0 = tpu.iota {dimensions = array<i32: 1>} : vector<1x128xi32>
    %cst = arith.constant 0.000000e+00 : f32
    %1 = vector.broadcast %cst : f32 to vector<8x256xf32>
    %c0 = arith.constant 0 : index
    %c0_0 = arith.constant 0 : index
    %2 = vector.load %arg11[%c0, %c0_0] : memref<8x256xf32, #tpu.memory_space<vmem>>, vector<8x256xf32>
    tpu.vector_store %arg11[%c0, %c0_0], %1 {strides = array<i32>} : memref<8x256xf32, #tpu.memory_space<vmem>>, vector<8x256xf32>,
    %c256 = arith.constant 256 : index
    %c0_1 = arith.constant 0 : index
    %3 = vector.load %arg6[%c256, %c0_1] : memref<264x128xf32, #tpu.memory_space<vmem>>, vector<1x128xf32>
    %c257 = arith.constant 257 : index
    %c0_2 = arith.constant 0 : index
    %4 = vector.load %arg6[%c257, %c0_2] : memref<264x128xf32, #tpu.memory_space<vmem>>, vector<1x128xf32>
    %c256_3 = arith.constant 256 : index
    %c0_4 = arith.constant 0 : index
    %5 = vector.load %arg3[%c256_3, %c0_4] : memref<264x384xf32, #tpu.memory_space<vmem>>, vector<1x384xf32>
    %c0_5 = arith.constant 0 : index
    %6 = memref.load %arg1[%c0_5] : memref<1xi32, #tpu.memory_space<smem>>
    %7 = arith.index_cast %6 : i32 to index
    %c0_6 = arith.constant 0 : index
    %8 = vector.load %arg2[%7, %c0_6] : memref<128x384xf32, #tpu.memory_space<vmem>>, vector<1x384xf32>
    %c0_7 = arith.constant 0 : index
    %c0_8 = arith.constant 0 : index
    %9 = vector.load %arg3[%c0_7, %c0_8] : memref<264x384xf32, #tpu.memory_space<vmem>>, vector<128x384xf32>
    %cst_9 = arith.constant dense<0.000000e+00> : vector<1x384xf32>
    %10 = tpu.matmul %3, %9, %cst_9 {dimension_numbers = #tpu.dot_dimension_numbers<[1], [0], [0], [1], [0, 0, 1, 1], [], []>} : vector<1x128xf32>, vector<128x384xf32>, vector<1x384xf32> -> vector<1x384xf32>
    %11 = arith.addf %8, %10 : vector<1x384xf32>
    %c128 = arith.constant 128 : index
    %c0_10 = arith.constant 0 : index
    %12 = vector.load %arg3[%c128, %c0_10] : memref<264x384xf32, #tpu.memory_space<vmem>>, vector<128x384xf32>
    %cst_11 = arith.constant dense<0.000000e+00> : vector<1x384xf32>
    %13 = tpu.matmul %4, %12, %cst_11 {dimension_numbers = #tpu.dot_dimension_numbers<[1], [0], [0], [1], [0, 0, 1, 1], [], []>} : vector<1x128xf32>, vector<128x384xf32>, vector<1x384xf32> -> vector<1x384xf32>
    %14 = arith.addf %13, %5 : vector<1x384xf32>
    %15 = vector.extract_strided_slice %11 {offsets = [0, 0], sizes = [1, 128], strides = [1, 1]} : vector<1x384xf32> to vector<1x128xf32>
    %16 = vector.extract_strided_slice %14 {offsets = [0, 0], sizes = [1, 128], strides = [1, 1]} : vector<1x384xf32> to vector<1x128xf32>
    %17 = arith.addf %15, %16 : vector<1x128xf32>
    %18 = arith.negf %17 : vector<1x128xf32>
    %19 = math.exp %18 : vector<1x128xf32>
    %cst_12 = arith.constant 1.000000e+00 : f32
    %20 = vector.broadcast %cst_12 : f32 to vector<1x128xf32>
    %21 = arith.addf %20, %19 : vector<1x128xf32>
    %22 = arith.divf %20, %21 : vector<1x128xf32>
    %23 = vector.extract_strided_slice %11 {offsets = [0, 128], sizes = [1, 128], strides = [1, 1]} : vector<1x384xf32> to vector<1x128xf32>
    %24 = vector.extract_strided_slice %14 {offsets = [0, 128], sizes = [1, 128], strides = [1, 1]} : vector<1x384xf32> to vector<1x128xf32>
    %25 = arith.addf %23, %24 : vector<1x128xf32>
    %26 = arith.negf %25 : vector<1x128xf32>
    %27 = math.exp %26 : vector<1x128xf32>
    %cst_13 = arith.constant 1.000000e+00 : f32
    %28 = vector.broadcast %cst_13 : f32 to vector<1x128xf32>
    %29 = arith.addf %28, %27 : vector<1x128xf32>
    %30 = arith.divf %28, %29 : vector<1x128xf32>
    %31 = vector.extract_strided_slice %11 {offsets = [0, 256], sizes = [1, 128], strides = [1, 1]} : vector<1x384xf32> to vector<1x128xf32>
    %32 = vector.extract_strided_slice %14 {offsets = [0, 256], sizes = [1, 128], strides = [1, 1]} : vector<1x384xf32> to vector<1x128xf32>
    %33 = arith.mulf %22, %32 : vector<1x128xf32>
    %34 = arith.addf %31, %33 : vector<1x128xf32>
    %35 = math.tanh %34 : vector<1x128xf32>
    %cst_14 = arith.constant 1.000000e+00 : f32
    %36 = vector.broadcast %cst_14 : f32 to vector<1x128xf32>
    %37 = arith.subf %36, %30 : vector<1x128xf32>
    %38 = arith.mulf %37, %35 : vector<1x128xf32>
    %39 = arith.mulf %30, %4 : vector<1x128xf32>
    %40 = arith.addf %38, %39 : vector<1x128xf32>
    %c0_15 = arith.constant 0 : index
    %c0_16 = arith.constant 0 : index
    %41 = vector.load %arg4[%c0_15, %c0_16] : memref<128x128xf32, #tpu.memory_space<vmem>>, vector<128x128xf32>
    %cst_17 = arith.constant dense<0.000000e+00> : vector<1x128xf32>
    %42 = tpu.matmul %40, %41, %cst_17 {dimension_numbers = #tpu.dot_dimension_numbers<[1], [0], [0], [1], [0, 0, 1, 1], [], []>} : vector<1x128xf32>, vector<128x128xf32>, vector<1x128xf32> -> vector<1x128xf32>
    %c128_18 = arith.constant 128 : index
    %c0_19 = arith.constant 0 : index
    %43 = vector.load %arg6[%c128_18, %c0_19] : memref<264x128xf32, #tpu.memory_space<vmem>>, vector<128x128xf32>
    %cst_20 = arith.constant dense<0.000000e+00> : vector<1x128xf32>
    %44 = tpu.matmul %42, %43, %cst_20 {dimension_numbers = #tpu.dot_dimension_numbers<[1], [0], [0], [1], [0, 0, 1, 1], [], []>} : vector<1x128xf32>, vector<128x128xf32>, vector<1x128xf32> -> vector<1x128xf32>
    %c8_i32 = arith.constant 8 : i32
    %45 = vector.broadcast %c8_i32 : i32 to vector<1x128xi32>
    %46 = arith.cmpi slt, %0, %45 : vector<1x128xi32>
    %cst_21 = arith.constant -1.000000e+30 : f32
    %47 = vector.broadcast %cst_21 : f32 to vector<1x128xf32>
    %48 = arith.select %46, %44, %47 : vector<1x128xi1>, vector<1x128xf32>
    %cst_22 = arith.constant dense<0xFF800000> : vector<1xf32>
    %49 = vector.multi_reduction <maximumf>, %48, %cst_22 [1] : vector<1x128xf32> to vector<1xf32>
    %cst_23 = arith.constant 0xFF800000 : f32
    %50 = vector.broadcast %cst_23 : f32 to vector<1xf32>
    %51 = arith.maximumf %50, %49 : vector<1xf32>
    %52 = vector.shape_cast %51 : vector<1xf32> to vector<1x1xf32>
    %53 = vector.broadcast %52 : vector<1x1xf32> to vector<1x128xf32>
    %54 = arith.subf %48, %53 : vector<1x128xf32>
    %55 = math.exp %54 : vector<1x128xf32>
    %cst_24 = arith.constant dense<0.000000e+00> : vector<1xf32>
    %56 = vector.multi_reduction <add>, %55, %cst_24 [1] : vector<1x128xf32> to vector<1xf32>
    %57 = vector.shape_cast %56 : vector<1xf32> to vector<1x1xf32>
    %58 = vector.broadcast %57 : vector<1x1xf32> to vector<1x128xf32>
    %59 = arith.divf %55, %58 : vector<1x128xf32>
    %c0_25 = arith.constant 0 : index
    %c0_26 = arith.constant 0 : index
    %60 = vector.load %arg6[%c0_25, %c0_26] : memref<264x128xf32, #tpu.memory_space<vmem>>, vector<128x128xf32>
    %cst_27 = arith.constant dense<0.000000e+00> : vector<1x128xf32>
    %61 = tpu.matmul %59, %60, %cst_27 {dimension_numbers = #tpu.dot_dimension_numbers<[1], [0], [0], [1], [0, 0, 1, 1], [], []>} : vector<1x128xf32>, vector<128x128xf32>, vector<1x128xf32> -> vector<1x128xf32>
    %c0_28 = arith.constant 0 : index
    %c0_29 = arith.constant 0 : index
    %62 = vector.load %arg11[%c0_28, %c0_29] : memref<8x256xf32, #tpu.memory_space<vmem>>, vector<1x128xf32>
    tpu.vector_store %arg11[%c0_28, %c0_29], %40 {strides = array<i32>} : memref<8x256xf32, #tpu.memory_space<vmem>>, vector<1x128xf32>,
    %c0_30 = arith.constant 0 : index
    %c128_31 = arith.constant 128 : index
    %63 = vector.load %arg11[%c0_30, %c128_31] : memref<8x256xf32, #tpu.memory_space<vmem>>, vector<1x128xf32>
    tpu.vector_store %arg11[%c0_30, %c128_31], %61 {strides = array<i32>} : memref<8x256xf32, #tpu.memory_space<vmem>>, vector<1x128xf32>,
    %c0_32 = arith.constant 0 : index
    %c0_33 = arith.constant 0 : index
    %64 = vector.load %arg10[%c0_32, %c0_33] : memref<8x128xf32, #tpu.memory_space<vmem>>, vector<1x128xf32>
    tpu.vector_store %arg10[%c0_32, %c0_33], %59 {strides = array<i32>} : memref<8x128xf32, #tpu.memory_space<vmem>>, vector<1x128xf32>,
    %cst_34 = arith.constant 0.000000e+00 : f32
    %65 = vector.broadcast %cst_34 : f32 to vector<7x128xf32>
    %c1 = arith.constant 1 : index
    %c0_35 = arith.constant 0 : index
    %66 = vector.load %arg10[%c1, %c0_35] : memref<8x128xf32, #tpu.memory_space<vmem>>, vector<7x128xf32>
    tpu.vector_store %arg10[%c1, %c0_35], %65 {strides = array<i32>} : memref<8x128xf32, #tpu.memory_space<vmem>>, vector<7x128xf32>,
    %c0_36 = arith.constant 0 : index
    %c0_37 = arith.constant 0 : index
    %67 = vector.load %arg11[%c0_36, %c0_37] : memref<8x256xf32, #tpu.memory_space<vmem>>, vector<8x256xf32>
    %c0_38 = arith.constant 0 : index
    %c0_39 = arith.constant 0 : index
    %68 = vector.load %arg5[%c0_38, %c0_39] : memref<264x128xf32, #tpu.memory_space<vmem>>, vector<256x128xf32>
    %cst_40 = arith.constant dense<0.000000e+00> : vector<8x128xf32>
    %69 = tpu.matmul %67, %68, %cst_40 {dimension_numbers = #tpu.dot_dimension_numbers<[1], [0], [0], [1], [0, 0, 1, 1], [], []>} : vector<8x256xf32>, vector<256x128xf32>, vector<8x128xf32> -> vector<8x128xf32>
    %c256_41 = arith.constant 256 : index
    %c0_42 = arith.constant 0 : index
    %70 = vector.load %arg5[%c256_41, %c0_42] : memref<264x128xf32, #tpu.memory_space<vmem>>, vector<1x128xf32>
    %71 = vector.broadcast %70 : vector<1x128xf32> to vector<8x128xf32>
    %72 = arith.addf %69, %71 : vector<8x128xf32>
    %cst_43 = arith.constant dense<0xFF800000> : vector<8xf32>
    %73 = vector.multi_reduction <maximumf>, %72, %cst_43 [1] : vector<8x128xf32> to vector<8xf32>
    %cst_44 = arith.constant 0xFF800000 : f32
    %74 = vector.broadcast %cst_44 : f32 to vector<8xf32>
    %75 = arith.maximumf %74, %73 : vector<8xf32>
    %76 = vector.shape_cast %75 : vector<8xf32> to vector<8x1xf32>
    %77 = vector.broadcast %76 : vector<8x1xf32> to vector<8x128xf32>
    %78 = arith.subf %72, %77 : vector<8x128xf32>
    %79 = math.exp %78 : vector<8x128xf32>
    %cst_45 = arith.constant dense<0.000000e+00> : vector<8xf32>
    %80 = vector.multi_reduction <add>, %79, %cst_45 [1] : vector<8x128xf32> to vector<8xf32>
    %81 = vector.shape_cast %80 : vector<8xf32> to vector<8x1xf32>
    %82 = math.log %81 : vector<8x1xf32>
    %83 = vector.broadcast %82 : vector<8x1xf32> to vector<8x128xf32>
    %84 = arith.subf %78, %83 : vector<8x128xf32>
    %c0_46 = arith.constant 0 : index
    %c0_47 = arith.constant 0 : index
    %85 = vector.load %arg7[%c0_46, %c0_47] : memref<8x128xf32, #tpu.memory_space<vmem>>, vector<8x128xf32>
    tpu.vector_store %arg7[%c0_46, %c0_47], %84 {strides = array<i32>} : memref<8x128xf32, #tpu.memory_space<vmem>>, vector<8x128xf32>,
    %86 = vector.extract_strided_slice %67 {offsets = [0, 0], sizes = [8, 128], strides = [1, 1]} : vector<8x256xf32> to vector<8x128xf32>
    %c0_48 = arith.constant 0 : index
    %c0_49 = arith.constant 0 : index
    %87 = vector.load %arg8[%c0_48, %c0_49] : memref<8x128xf32, #tpu.memory_space<vmem>>, vector<8x128xf32>
    tpu.vector_store %arg8[%c0_48, %c0_49], %86 {strides = array<i32>} : memref<8x128xf32, #tpu.memory_space<vmem>>, vector<8x128xf32>,
    %88 = vector.extract_strided_slice %67 {offsets = [0, 128], sizes = [8, 128], strides = [1, 1]} : vector<8x256xf32> to vector<8x128xf32>
    %c0_50 = arith.constant 0 : index
    %c0_51 = arith.constant 0 : index
    %89 = vector.load %arg9[%c0_50, %c0_51] : memref<8x128xf32, #tpu.memory_space<vmem>>, vector<8x128xf32>
    tpu.vector_store %arg9[%c0_50, %c0_51], %88 {strides = array<i32>} : memref<8x128xf32, #tpu.memory_space<vmem>>, vector<8x128xf32>,
    return
  }
  func.func @transform_0(%arg0: i32, %arg1: memref<1xi32, #tpu.memory_space<smem>>) -> (i32, i32) {
    %c0_i32 = arith.constant 0 : i32
    %c0_i32_0 = arith.constant 0 : i32
    %c0_i32_1 = arith.constant 0 : i32
    return %c0_i32, %c0_i32_0 : i32, i32
  }
  func.func @transform_1(%arg0: i32, %arg1: memref<1xi32, #tpu.memory_space<smem>>) -> (i32, i32) {
    %c0_i32 = arith.constant 0 : i32
    %c0_i32_0 = arith.constant 0 : i32
    %c0_i32_1 = arith.constant 0 : i32
    return %c0_i32, %c0_i32_0 : i32, i32
  }
  func.func @transform_2(%arg0: i32, %arg1: memref<1xi32, #tpu.memory_space<smem>>) -> (i32, i32) {
    %c0_i32 = arith.constant 0 : i32
    %c0_i32_0 = arith.constant 0 : i32
    %c0_i32_1 = arith.constant 0 : i32
    return %c0_i32, %c0_i32_0 : i32, i32
  }
  func.func @transform_3(%arg0: i32, %arg1: memref<1xi32, #tpu.memory_space<smem>>) -> (i32, i32) {
    %c0_i32 = arith.constant 0 : i32
    %c0_i32_0 = arith.constant 0 : i32
    %c0_i32_1 = arith.constant 0 : i32
    return %c0_i32, %c0_i32_0 : i32, i32
  }
  func.func @transform_4(%arg0: i32, %arg1: memref<1xi32, #tpu.memory_space<smem>>) -> (i32, i32) {
    %c0_i32 = arith.constant 0 : i32
    %c0_i32_0 = arith.constant 0 : i32
    %c0_i32_1 = arith.constant 0 : i32
    return %c0_i32, %c0_i32_0 : i32, i32
  }
  func.func @transform_5(%arg0: i32, %arg1: memref<1xi32, #tpu.memory_space<smem>>) -> (i32, i32) {
    %c0_i32 = arith.constant 0 : i32
    %c0_i32_0 = arith.constant 0 : i32
    %c0_i32_1 = arith.constant 0 : i32
    return %c0_i32, %c0_i32_0 : i32, i32
  }
  func.func @transform_6(%arg0: i32, %arg1: memref<1xi32, #tpu.memory_space<smem>>) -> (i32, i32) {
    %c0_i32 = arith.constant 0 : i32
    %c0_i32_0 = arith.constant 0 : i32
    %c0_i32_1 = arith.constant 0 : i32
    return %c0_i32, %c0_i32_0 : i32, i32
  }
  func.func @transform_7(%arg0: i32, %arg1: memref<1xi32, #tpu.memory_space<smem>>) -> (i32, i32) {
    %c0_i32 = arith.constant 0 : i32
    %c0_i32_0 = arith.constant 0 : i32
    %c0_i32_1 = arith.constant 0 : i32
    return %c0_i32, %c0_i32_0 : i32, i32
  }
  func.func @transform_8(%arg0: i32, %arg1: memref<1xi32, #tpu.memory_space<smem>>) -> (i32, i32) {
    %c0_i32 = arith.constant 0 : i32
    %c0_i32_0 = arith.constant 0 : i32
    %c0_i32_1 = arith.constant 0 : i32
    return %c0_i32, %c0_i32_0 : i32, i32
  }
}

</mosaic_0001>

<llo_original>
// kernel: tpu_custom_call.1
$region0: #{tpu_custom_call.1}
  #allocation0 [shape = 'u32[]', space=smem, size = 0x4, offset = 0x4, fixed_abs, tag = 'smem constant byte address 0x4 - core index']
  #allocation1 [shape = 'u32[144,128]{1,0:T(1,128)}', space=vmem, size = 0x12000, scoped, tag = 'internal scratch']
  #allocation2 [shape = 'f32[8,256]{1,0:T(8,128)}', space=vmem, size = 0x2000, scoped, tag = 'scratch operand']
  #allocation3 [shape = 's32[1]{0}', space=sflag, size = 0x4, scoped, tag = 'scoped memory for tpu_custom_call.1']
  #allocation4 [shape = 's32[1]{0:T(128)S(6)}', space=smem, size = 0x200, scoped, tag = 'prefetched SMEM operand 0']
  %s0 = inlined_call_operand.<no memory space> [shape: s32[1], index: 0, kind: input, shape index: {}]
  %s1 = inlined_call_operand.hbm [shape: f32[128,384], index: 1, kind: input, shape index: {}]
  %s2 = inlined_call_operand.hbm [shape: f32[264,384], index: 2, kind: input, shape index: {}]
  %s3 = inlined_call_operand.hbm [shape: f32[128,128], index: 3, kind: input, shape index: {}]
  %s4 = inlined_call_operand.hbm [shape: f32[264,128], index: 4, kind: input, shape index: {}]
  %s5 = inlined_call_operand.hbm [shape: f32[264,128], index: 5, kind: input, shape index: {}]
  %s6 = inlined_call_operand.hbm [shape: f32[8,128], index: 6, kind: output, shape index: {0}]
  %s7 = inlined_call_operand.hbm [shape: f32[8,128], index: 7, kind: output, shape index: {1}]
  %s8 = inlined_call_operand.hbm [shape: f32[8,128], index: 8, kind: output, shape index: {2}]
  %s9 = inlined_call_operand.hbm [shape: f32[8,128], index: 9, kind: output, shape index: {3}]
  %10 = xla_tuple %s6, %s7, %s8, %s9
  %s11 = sld [smem:[#allocation0]]
  $region74: #{tpu_custom_call.1} parent=0
    _
  %s13 = ssub.s32 1, %s11
  %s14 = scalar_select 0, %s13, %s11
  %15 = sst [smem:[#allocation4]] %s0
  $region1: #{tpu_custom_call.1} parent=0
    #allocation5 [shape = 'u8[196608]{0}', space=vmem, size = 0x30000, scoped, tag = 'input window, operand 1, single buffered']
    #allocation6 [shape = 's32[1]{0}', space=sflag, size = 0x4, scoped, tag = 'scoped memory for tpu_custom_call.1']
    #allocation7 [shape = 's32[1]{0}', space=sflag, size = 0x4, scoped, tag = 'scoped memory for tpu_custom_call.1']
    #allocation8 [shape = 'u8[405504]{0}', space=vmem, size = 0x63000, scoped, tag = 'input window, operand 2, single buffered']
    #allocation9 [shape = 's32[1]{0}', space=sflag, size = 0x4, scoped, tag = 'scoped memory for tpu_custom_call.1']
    #allocation10 [shape = 'u8[65536]{0}', space=vmem, size = 0x10000, scoped, tag = 'input window, operand 3, single buffered']
    #allocation11 [shape = 'u8[135168]{0}', space=vmem, size = 0x21000, scoped, tag = 'input window, operand 4, single buffered']
    #allocation12 [shape = 's32[1]{0}', space=sflag, size = 0x4, scoped, tag = 'scoped memory for tpu_custom_call.1']
    #allocation13 [shape = 'u8[135168]{0}', space=vmem, size = 0x21000, scoped, tag = 'input window, operand 5, single buffered']
    #allocation14 [shape = 'u8[4096]{0}', space=vmem, size = 0x1000, scoped, tag = 'output window, operand 0, single buffered']
    #allocation15 [shape = 'u8[4096]{0}', space=vmem, size = 0x1000, scoped, tag = 'output window, operand 1, single buffered']
    #allocation16 [shape = 's32[1]{0}', space=sflag, size = 0x4, scoped, tag = 'scoped memory for tpu_custom_call.1']
    #allocation17 [shape = 'u8[4096]{0}', space=vmem, size = 0x1000, scoped, tag = 'output window, operand 2, single buffered']
    #allocation18 [shape = 'u8[4096]{0}', space=vmem, size = 0x1000, scoped, tag = 'output window, operand 3, single buffered']
    #allocation19 [shape = 's32[1]{0}', space=sflag, size = 0x4, scoped, tag = 'scoped memory for tpu_custom_call.1']
    %16 = vsyncpa [#allocation6], 0
    %17 = vsyncpa [#allocation9], 0
    %18 = vsyncpa [#allocation12], 0
    %19 = vsyncpa [#allocation7], 0
    %20 = vsyncpa [#allocation16], 0
    %21 = vsyncpa [#allocation19], 0
    // Predicated region
    $region2: #{tpu_custom_call.1} parent=1 // pred_check
      _
    $region3: #{tpu_custom_call.1} parent=1 // pred_check_branch
      %23 = sbr.rel (0) target = $region5
    $region4: #{tpu_custom_call.1} parent=1 // pred_region
      %s25 = ssub.s32 6144, 6144
      %26 = vsyncadd [#allocation6], %s25
      %s27 = sshll.u32 [#allocation5], 4
      %s28 = int_to_ptr.vmem [resolvable:$true] %s27
      %33 = dma.hbm_to_vmem [thread:$0]  %s1, 6144, %s28, [#allocation6], 384, 384, 24
    $region5: #{tpu_custom_call.1} parent=1 // pred_fallthru
      _
    // Predicated region
    $region6: #{tpu_custom_call.1} parent=1 // pred_check
      _
    $region7: #{tpu_custom_call.1} parent=1 // pred_check_branch
      %35 = sbr.rel (0) target = $region9
    $region8: #{tpu_custom_call.1} parent=1 // pred_region
      %s37 = ssub.s32 12672, 12672
      %38 = vsyncadd [#allocation9], %s37
      %s39 = sshll.u32 [#allocation8], 4
      %s40 = int_to_ptr.vmem [resolvable:$true] %s39
      %45 = dma.hbm_to_vmem [thread:$0]  %s2, 12672, %s40, [#allocation9], 384, 384, 24
    $region9: #{tpu_custom_call.1} parent=1 // pred_fallthru
      _
    // Predicated region
    $region10: #{tpu_custom_call.1} parent=1 // pred_check
      _
    $region11: #{tpu_custom_call.1} parent=1 // pred_check_branch
      %47 = sbr.rel (0) target = $region13
    $region12: #{tpu_custom_call.1} parent=1 // pred_region
      %s49 = ssub.s32 2048, 2048
      %50 = vsyncadd [#allocation9], %s49
      %s51 = sshll.u32 [#allocation10], 4
      %s52 = int_to_ptr.vmem [resolvable:$true] %s51
      %57 = dma.hbm_to_vmem [thread:$0]  %s3, 2048, %s52, [#allocation9], 128, 128, 8
    $region13: #{tpu_custom_call.1} parent=1 // pred_fallthru
      _
    // Predicated region
    $region14: #{tpu_custom_call.1} parent=1 // pred_check
      _
    $region15: #{tpu_custom_call.1} parent=1 // pred_check_branch
      %59 = sbr.rel (0) target = $region17
    $region16: #{tpu_custom_call.1} parent=1 // pred_region
      %s61 = ssub.s32 4224, 4224
      %62 = vsyncadd [#allocation12], %s61
      %s63 = sshll.u32 [#allocation11], 4
      %s64 = int_to_ptr.vmem [resolvable:$true] %s63
      %69 = dma.hbm_to_vmem [thread:$0]  %s4, 4224, %s64, [#allocation12], 128, 128, 8
    $region17: #{tpu_custom_call.1} parent=1 // pred_fallthru
      _
    // Predicated region
    $region18: #{tpu_custom_call.1} parent=1 // pred_check
      _
    $region19: #{tpu_custom_call.1} parent=1 // pred_check_branch
      %71 = sbr.rel (0) target = $region21
    $region20: #{tpu_custom_call.1} parent=1 // pred_region
      %s73 = ssub.s32 4224, 4224
      %74 = vsyncadd [#allocation12], %s73
      %s75 = sshll.u32 [#allocation13], 4
      %s76 = int_to_ptr.vmem [resolvable:$true] %s75
      %81 = dma.hbm_to_vmem [thread:$0]  %s5, 4224, %s76, [#allocation12], 128, 128, 8
    $region21: #{tpu_custom_call.1} parent=1 // pred_fallthru
      _
    // Predicated region
    $region22: #{tpu_custom_call.1} parent=1 // pred_check
      _
    $region23: #{tpu_custom_call.1} parent=1 // pred_check_branch
      %83 = sbr.rel (0) target = $region25
    $region24: #{tpu_custom_call.1} parent=1 // pred_region
      %84 = dma.done [#allocation6], 6144
    $region25: #{tpu_custom_call.1} parent=1 // pred_fallthru
      _
    // Predicated region
    $region26: #{tpu_custom_call.1} parent=1 // pred_check
      _
    $region27: #{tpu_custom_call.1} parent=1 // pred_check_branch
      %86 = sbr.rel (0) target = $region29
    $region28: #{tpu_custom_call.1} parent=1 // pred_region
      %87 = dma.done [#allocation9], 12672
    $region29: #{tpu_custom_call.1} parent=1 // pred_fallthru
      _
    // Predicated region
    $region30: #{tpu_custom_call.1} parent=1 // pred_check
      _
    $region31: #{tpu_custom_call.1} parent=1 // pred_check_branch
      %89 = sbr.rel (0) target = $region33
    $region32: #{tpu_custom_call.1} parent=1 // pred_region
      %90 = dma.done [#allocation9], 2048
    $region33: #{tpu_custom_call.1} parent=1 // pred_fallthru
      _
    // Predicated region
    $region34: #{tpu_custom_call.1} parent=1 // pred_check
      _
    $region35: #{tpu_custom_call.1} parent=1 // pred_check_branch
      %92 = sbr.rel (0) target = $region37
    $region36: #{tpu_custom_call.1} parent=1 // pred_region
      %93 = dma.done [#allocation12], 4224
    $region37: #{tpu_custom_call.1} parent=1 // pred_fallthru
      _
    // Predicated region
    $region38: #{tpu_custom_call.1} parent=1 // pred_check
      _
    $region39: #{tpu_custom_call.1} parent=1 // pred_check_branch
      %95 = sbr.rel (0) target = $region41
    $region40: #{tpu_custom_call.1} parent=1 // pred_region
      %96 = dma.done [#allocation12], 4224
    $region41: #{tpu_custom_call.1} parent=1 // pred_fallthru
      _
    %v97 = vlaneseq
    %v98 = vand.u32 %v97, 127
    %99 = vst [vmem:[#allocation2] sm:$0xff] 0.0
    %100 = vst [vmem:[#allocation2 + $0x8] sm:$0xff] 0.0
    %v101 = vld [vmem:[#allocation13 + $0x100] sm:$0x1]
    %v102 = vld [vmem:[#allocation13 + $0x101] sm:$0x1]
    %s103 = scalar_lea.vmem [#allocation8], 768
    %v104 = vld [vmem:[%s103] ss:$8 sm:$0x7]
    %s105 = sld [smem:[#allocation4]]
    %s106 = sshra.s32 %s105, 3
    %s107 = sand.u32 %s105, 7
    %s108 = sshra.s32 %s105, 3
    %s109 = sand.u32 %s105, 7
    %s110 = smul.u32 %s106, 3
    %s111 = smul.u32 %s110, 8
    %s112 = sadd.s32 %s111, %s109
    %s113 = scalar_lea.vmem [#allocation5], %s112
    %v114 = vld [vmem:[%s113] ss:$8 sm:$0x7]
    %v115 = vld [vmem:[#allocation8] sm:$0xff]
    %v116 = vld [vmem:[#allocation8 + $0x8] sm:$0xff]
    %v117 = vld [vmem:[#allocation8 + $0x10] sm:$0xff]
    %v118 = vld [vmem:[#allocation8 + $0x18] sm:$0xff]
    %v119 = vld [vmem:[#allocation8 + $0x20] sm:$0xff]
    %v120 = vld [vmem:[#allocation8 + $0x28] sm:$0xff]
    %v121 = vld [vmem:[#allocation8 + $0x30] sm:$0xff]
    %v122 = vld [vmem:[#allocation8 + $0x38] sm:$0xff]
    %v123 = vld [vmem:[#allocation8 + $0x40] sm:$0xff]
    %v124 = vld [vmem:[#allocation8 + $0x48] sm:$0xff]
    %v125 = vld [vmem:[#allocation8 + $0x50] sm:$0xff]
    %v126 = vld [vmem:[#allocation8 + $0x58] sm:$0xff]
    %v127 = vld [vmem:[#allocation8 + $0x60] sm:$0xff]
    %v128 = vld [vmem:[#allocation8 + $0x68] sm:$0xff]
    %v129 = vld [vmem:[#allocation8 + $0x70] sm:$0xff]
    %v130 = vld [vmem:[#allocation8 + $0x78] sm:$0xff]
    %v131 = vld [vmem:[#allocation8 + $0x80] sm:$0xff]
    %v132 = vld [vmem:[#allocation8 + $0x88] sm:$0xff]
    %v133 = vld [vmem:[#allocation8 + $0x90] sm:$0xff]
    %v134 = vld [vmem:[#allocation8 + $0x98] sm:$0xff]
    %v135 = vld [vmem:[#allocation8 + $0xa0] sm:$0xff]
    %v136 = vld [vmem:[#allocation8 + $0xa8] sm:$0xff]
    %v137 = vld [vmem:[#allocation8 + $0xb0] sm:$0xff]
    %v138 = vld [vmem:[#allocation8 + $0xb8] sm:$0xff]
    %v139 = vld [vmem:[#allocation8 + $0xc0] sm:$0xff]
    %v140 = vld [vmem:[#allocation8 + $0xc8] sm:$0xff]
    %v141 = vld [vmem:[#allocation8 + $0xd0] sm:$0xff]
    %v142 = vld [vmem:[#allocation8 + $0xd8] sm:$0xff]
    %v143 = vld [vmem:[#allocation8 + $0xe0] sm:$0xff]
    %v144 = vld [vmem:[#allocation8 + $0xe8] sm:$0xff]
    %v145 = vld [vmem:[#allocation8 + $0xf0] sm:$0xff]
    %v146 = vld [vmem:[#allocation8 + $0xf8] sm:$0xff]
    %v147 = vld [vmem:[#allocation8 + $0x100] sm:$0xff]
    %v148 = vld [vmem:[#allocation8 + $0x108] sm:$0xff]
    %v149 = vld [vmem:[#allocation8 + $0x110] sm:$0xff]
    %v150 = vld [vmem:[#allocation8 + $0x118] sm:$0xff]
    %v151 = vld [vmem:[#allocation8 + $0x120] sm:$0xff]
    %v152 = vld [vmem:[#allocation8 + $0x128] sm:$0xff]
    %v153 = vld [vmem:[#allocation8 + $0x130] sm:$0xff]
    %v154 = vld [vmem:[#allocation8 + $0x138] sm:$0xff]
    %v155 = vld [vmem:[#allocation8 + $0x140] sm:$0xff]
    %v156 = vld [vmem:[#allocation8 + $0x148] sm:$0xff]
    %v157 = vld [vmem:[#allocation8 + $0x150] sm:$0xff]
    %v158 = vld [vmem:[#allocation8 + $0x158] sm:$0xff]
    %v159 = vld [vmem:[#allocation8 + $0x160] sm:$0xff]
    %v160 = vld [vmem:[#allocation8 + $0x168] sm:$0xff]
    %v161 = vld [vmem:[#allocation8 + $0x170] sm:$0xff]
    %v162 = vld [vmem:[#allocation8 + $0x178] sm:$0xff]
    %163 = vmatprep.subr.mxu0 %v116
    %164 = vmatpush1.msra.mxu0 %v115
    %165 = vmatprep.subr.mxu0 %v119
    %166 = vmatpush1.msra.mxu0 %v118
    %167 = vmatprep.subr.mxu0 %v122
    %168 = vmatpush1.msra.mxu0 %v121
    %169 = vmatprep.subr.mxu0 %v125
    %170 = vmatpush1.msra.mxu0 %v124
    %171 = vmatprep.subr.mxu0 %v128
    %172 = vmatpush1.msra.mxu0 %v127
    %173 = vmatprep.subr.mxu0 %v131
    %174 = vmatpush1.msra.mxu0 %v130
    %175 = vmatprep.subr.mxu0 %v134
    %176 = vmatpush1.msra.mxu0 %v133
    %177 = vmatprep.subr.mxu0 %v137
    %178 = vmatpush1.msra.mxu0 %v136
    %179 = vmatprep.subr.mxu0 %v140
    %180 = vmatpush1.msra.mxu0 %v139
    %181 = vmatprep.subr.mxu0 %v143
    %182 = vmatpush1.msra.mxu0 %v142
    %183 = vmatprep.subr.mxu0 %v146
    %184 = vmatpush1.msra.mxu0 %v145
    %185 = vmatprep.subr.mxu0 %v149
    %186 = vmatpush1.msra.mxu0 %v148
    %187 = vmatprep.subr.mxu0 %v152
    %188 = vmatpush1.msra.mxu0 %v151
    %189 = vmatprep.subr.mxu0 %v155
    %190 = vmatpush1.msra.mxu0 %v154
    %191 = vmatprep.subr.mxu0 %v158
    %192 = vmatpush1.msra.mxu0 %v157
    %193 = vmatprep.subr.mxu0 %v161
    %194 = vmatpush1.msra.mxu0 %v160
    %195 = vmatprep.subr.mxu0 0.0
    %196 = vmatpush1.msra.mxu0 0.0
    %197 = vmatprep.subr.mxu0 0.0
    %198 = vmatpush1.msra.mxu0 0.0
    %199 = vmatprep.subr.mxu0 0.0
    %200 = vmatpush1.msra.mxu0 0.0
    %201 = vmatprep.subr.mxu0 0.0
    %202 = vmatpush1.msra.mxu0 0.0
    %203 = vmatprep.subr.mxu0 0.0
    %204 = vmatpush1.msra.mxu0 0.0
    %205 = vmatprep.subr.mxu0 0.0
    %206 = vmatpush1.msra.mxu0 0.0
    %207 = vmatprep.subr.mxu0 0.0
    %208 = vmatpush1.msra.mxu0 0.0
    %209 = vmatprep.subr.mxu0 0.0
    %210 = vmatpush1.msra.mxu0 0.0
    %211 = vmatprep.subr.mxu0 0.0
    %212 = vmatpush1.msra.mxu0 0.0
    %213 = vmatprep.subr.mxu0 0.0
    %214 = vmatpush1.msra.mxu0 0.0
    %215 = vmatprep.subr.mxu0 0.0
    %216 = vmatpush1.msra.mxu0 0.0
    %217 = vmatprep.subr.mxu0 0.0
    %218 = vmatpush1.msra.mxu0 0.0
    %219 = vmatprep.subr.mxu0 0.0
    %220 = vmatpush1.msra.mxu0 0.0
    %221 = vmatprep.subr.mxu0 0.0
    %222 = vmatpush1.msra.mxu0 0.0
    %223 = vmatprep.subr.mxu0 0.0
    %224 = vmatpush1.msra.mxu0 0.0
    %225 = vmatprep.subr.mxu0 0.0
    %226 = vmatpush1.msra.mxu0 0.0
    %227 = vmatprep.mubr.f32.mxu0 0.0
    %228 = vmatmul.mubr.f32.gmra.mrb[0].mxu0 %v101
    %v229 = vpop.f32.mrb[0].mxu0
    %v230 = vadd.f32 0.0, %v229
    %v231 = vpop.f32.mrb[0].mxu0
    %v232 = vadd.f32 0.0, %v231
    %233 = vdwg.mxu0
    %234 = vmatprep.subr.mxu0 0.0
    %235 = vmatpush1.msra.mxu0 %v117
    %236 = vmatprep.subr.mxu0 0.0
    %237 = vmatpush1.msra.mxu0 %v120
    %238 = vmatprep.subr.mxu0 0.0
    %239 = vmatpush1.msra.mxu0 %v123
    %240 = vmatprep.subr.mxu0 0.0
    %241 = vmatpush1.msra.mxu0 %v126
    %242 = vmatprep.subr.mxu0 0.0
    %243 = vmatpush1.msra.mxu0 %v129
    %244 = vmatprep.subr.mxu0 0.0
    %245 = vmatpush1.msra.mxu0 %v132
    %246 = vmatprep.subr.mxu0 0.0
    %247 = vmatpush1.msra.mxu0 %v135
    %248 = vmatprep.subr.mxu0 0.0
    %249 = vmatpush1.msra.mxu0 %v138
    %250 = vmatprep.subr.mxu0 0.0
    %251 = vmatpush1.msra.mxu0 %v141
    %252 = vmatprep.subr.mxu0 0.0
    %253 = vmatpush1.msra.mxu0 %v144
    %254 = vmatprep.subr.mxu0 0.0
    %255 = vmatpush1.msra.mxu0 %v147
    %256 = vmatprep.subr.mxu0 0.0
    %257 = vmatpush1.msra.mxu0 %v150
    %258 = vmatprep.subr.mxu0 0.0
    %259 = vmatpush1.msra.mxu0 %v153
    %260 = vmatprep.subr.mxu0 0.0
    %261 = vmatpush1.msra.mxu0 %v156
    %262 = vmatprep.subr.mxu0 0.0
    %263 = vmatpush1.msra.mxu0 %v159
    %264 = vmatprep.subr.mxu0 0.0
    %265 = vmatpush1.msra.mxu0 %v162
    %266 = vmatprep.subr.mxu0 0.0
    %267 = vmatpush1.msra.mxu0 0.0
    %268 = vmatprep.subr.mxu0 0.0
    %269 = vmatpush1.msra.mxu0 0.0
    %270 = vmatprep.subr.mxu0 0.0
    %271 = vmatpush1.msra.mxu0 0.0
    %272 = vmatprep.subr.mxu0 0.0
    %273 = vmatpush1.msra.mxu0 0.0
    %274 = vmatprep.subr.mxu0 0.0
    %275 = vmatpush1.msra.mxu0 0.0
    %276 = vmatprep.subr.mxu0 0.0
    %277 = vmatpush1.msra.mxu0 0.0
    %278 = vmatprep.subr.mxu0 0.0
    %279 = vmatpush1.msra.mxu0 0.0
    %280 = vmatprep.subr.mxu0 0.0
    %281 = vmatpush1.msra.mxu0 0.0
    %282 = vmatprep.subr.mxu0 0.0
    %283 = vmatpush1.msra.mxu0 0.0
    %284 = vmatprep.subr.mxu0 0.0
    %285 = vmatpush1.msra.mxu0 0.0
    %286 = vmatprep.subr.mxu0 0.0
    %287 = vmatpush1.msra.mxu0 0.0
    %288 = vmatprep.subr.mxu0 0.0
    %289 = vmatpush1.msra.mxu0 0.0
    %290 = vmatprep.subr.mxu0 0.0
    %291 = vmatpush1.msra.mxu0 0.0
    %292 = vmatprep.subr.mxu0 0.0
    %293 = vmatpush1.msra.mxu0 0.0
    %294 = vmatprep.subr.mxu0 0.0
    %295 = vmatpush1.msra.mxu0 0.0
    %296 = vmatprep.subr.mxu0 0.0
    %297 = vmatpush1.msra.mxu0 0.0
    %298 = vmatprep.mubr.f32.mxu0 0.0
    %299 = vmatmul.mubr.f32.gmra.mrb[0].mxu0 %v101
    %v300 = vpop.f32.mrb[0].mxu0
    %v301 = vadd.f32 0.0, %v300
    %v302 = vpop.f32.mrb[0].mxu0
    %303 = vdwg.mxu0
    %v307 = vcombine.low %v230, %v232
    %v309 = vunpack.c.l.s4 1966171168
    %v310 = vunpack.c.0.s8 %v309
    %v311 = vlaneseq
    %v312 = vshrl.u32 %v311, 7
    %v313 = vsub.s32 %v310, %v312
    %v314 = vrot.slane %v307, %v313
    %v316 = vunpack.c.l.s4 1966171168
    %v317 = vunpack.c.0.s8 %v316
    %v318 = vlaneseq
    %v319 = vshrl.u32 %v318, 7
    %v320 = vsub.s32 %v317, %v319
    %v321 = vrot.slane %v301, %v320
    %v322 = vcombine.low %v314, %v321
    %v324 = vunpack.c.l.s4 1966171168
    %v325 = vunpack.c.0.s8 %v324
    %v326 = vlaneseq
    %v327 = vshrl.u32 %v326, 7
    %v328 = vsub.s32 %v325, %v327
    %v329 = vrot.slane %v322, %v328
    %v331 = vadd.f32 %v114, %v329
    %v332 = vld [vmem:[#allocation8 + $0x180] sm:$0xff]
    %v333 = vld [vmem:[#allocation8 + $0x188] sm:$0xff]
    %v334 = vld [vmem:[#allocation8 + $0x190] sm:$0xff]
    %v335 = vld [vmem:[#allocation8 + $0x198] sm:$0xff]
    %v336 = vld [vmem:[#allocation8 + $0x1a0] sm:$0xff]
    %v337 = vld [vmem:[#allocation8 + $0x1a8] sm:$0xff]
    %v338 = vld [vmem:[#allocation8 + $0x1b0] sm:$0xff]
    %v339 = vld [vmem:[#allocation8 + $0x1b8] sm:$0xff]
    %v340 = vld [vmem:[#allocation8 + $0x1c0] sm:$0xff]
    %v341 = vld [vmem:[#allocation8 + $0x1c8] sm:$0xff]
    %v342 = vld [vmem:[#allocation8 + $0x1d0] sm:$0xff]
    %v343 = vld [vmem:[#allocation8 + $0x1d8] sm:$0xff]
    %v344 = vld [vmem:[#allocation8 + $0x1e0] sm:$0xff]
    %v345 = vld [vmem:[#allocation8 + $0x1e8] sm:$0xff]
    %v346 = vld [vmem:[#allocation8 + $0x1f0] sm:$0xff]
    %v347 = vld [vmem:[#allocation8 + $0x1f8] sm:$0xff]
    %v348 = vld [vmem:[#allocation8 + $0x200] sm:$0xff]
    %v349 = vld [vmem:[#allocation8 + $0x208] sm:$0xff]
    %v350 = vld [vmem:[#allocation8 + $0x210] sm:$0xff]
    %v351 = vld [vmem:[#allocation8 + $0x218] sm:$0xff]
    %v352 = vld [vmem:[#allocation8 + $0x220] sm:$0xff]
    %v353 = vld [vmem:[#allocation8 + $0x228] sm:$0xff]
    %v354 = vld [vmem:[#allocation8 + $0x230] sm:$0xff]
    %v355 = vld [vmem:[#allocation8 + $0x238] sm:$0xff]
    %v356 = vld [vmem:[#allocation8 + $0x240] sm:$0xff]
    %v357 = vld [vmem:[#allocation8 + $0x248] sm:$0xff]
    %v358 = vld [vmem:[#allocation8 + $0x250] sm:$0xff]
    %v359 = vld [vmem:[#allocation8 + $0x258] sm:$0xff]
    %v360 = vld [vmem:[#allocation8 + $0x260] sm:$0xff]
    %v361 = vld [vmem:[#allocation8 + $0x268] sm:$0xff]
    %v362 = vld [vmem:[#allocation8 + $0x270] sm:$0xff]
    %v363 = vld [vmem:[#allocation8 + $0x278] sm:$0xff]
    %v364 = vld [vmem:[#allocation8 + $0x280] sm:$0xff]
    %v365 = vld [vmem:[#allocation8 + $0x288] sm:$0xff]
    %v366 = vld [vmem:[#allocation8 + $0x290] sm:$0xff]
    %v367 = vld [vmem:[#allocation8 + $0x298] sm:$0xff]
    %v368 = vld [vmem:[#allocation8 + $0x2a0] sm:$0xff]
    %v369 = vld [vmem:[#allocation8 + $0x2a8] sm:$0xff]
    %v370 = vld [vmem:[#allocation8 + $0x2b0] sm:$0xff]
    %v371 = vld [vmem:[#allocation8 + $0x2b8] sm:$0xff]
    %v372 = vld [vmem:[#allocation8 + $0x2c0] sm:$0xff]
    %v373 = vld [vmem:[#allocation8 + $0x2c8] sm:$0xff]
    %v374 = vld [vmem:[#allocation8 + $0x2d0] sm:$0xff]
    %v375 = vld [vmem:[#allocation8 + $0x2d8] sm:$0xff]
    %v376 = vld [vmem:[#allocation8 + $0x2e0] sm:$0xff]
    %v377 = vld [vmem:[#allocation8 + $0x2e8] sm:$0xff]
    %v378 = vld [vmem:[#allocation8 + $0x2f0] sm:$0xff]
    %v379 = vld [vmem:[#allocation8 + $0x2f8] sm:$0xff]
    %v381 = vlaneseq
    %v382 = vshrl.u32 %v381, 7
    %v383 = vsub.s32 0, %v382
    %v384 = vrot.slane %v104, %v383
    %v385 = vlaneseq
    %v386 = vshrl.u32 %v385, 7
    %v387 = vsub.s32 1, %v386
    %v388 = vrot.slane %v104, %v387
    %v389 = vlaneseq
    %v390 = vshrl.u32 %v389, 7
    %v391 = vsub.s32 2, %v390
    %v392 = vrot.slane %v104, %v391
    %396 = vmatprep.subr.mxu0 %v333
    %397 = vmatpush1.msra.mxu0 %v332
    %398 = vmatprep.subr.mxu0 %v336
    %399 = vmatpush1.msra.mxu0 %v335
    %400 = vmatprep.subr.mxu0 %v339
    %401 = vmatpush1.msra.mxu0 %v338
    %402 = vmatprep.subr.mxu0 %v342
    %403 = vmatpush1.msra.mxu0 %v341
    %404 = vmatprep.subr.mxu0 %v345
    %405 = vmatpush1.msra.mxu0 %v344
    %406 = vmatprep.subr.mxu0 %v348
    %407 = vmatpush1.msra.mxu0 %v347
    %408 = vmatprep.subr.mxu0 %v351
    %409 = vmatpush1.msra.mxu0 %v350
    %410 = vmatprep.subr.mxu0 %v354
    %411 = vmatpush1.msra.mxu0 %v353
    %412 = vmatprep.subr.mxu0 %v357
    %413 = vmatpush1.msra.mxu0 %v356
    %414 = vmatprep.subr.mxu0 %v360
    %415 = vmatpush1.msra.mxu0 %v359
    %416 = vmatprep.subr.mxu0 %v363
    %417 = vmatpush1.msra.mxu0 %v362
    %418 = vmatprep.subr.mxu0 %v366
    %419 = vmatpush1.msra.mxu0 %v365
    %420 = vmatprep.subr.mxu0 %v369
    %421 = vmatpush1.msra.mxu0 %v368
    %422 = vmatprep.subr.mxu0 %v372
    %423 = vmatpush1.msra.mxu0 %v371
    %424 = vmatprep.subr.mxu0 %v375
    %425 = vmatpush1.msra.mxu0 %v374
    %426 = vmatprep.subr.mxu0 %v378
    %427 = vmatpush1.msra.mxu0 %v377
    %428 = vmatprep.subr.mxu0 0.0
    %429 = vmatpush1.msra.mxu0 0.0
    %430 = vmatprep.subr.mxu0 0.0
    %431 = vmatpush1.msra.mxu0 0.0
    %432 = vmatprep.subr.mxu0 0.0
    %433 = vmatpush1.msra.mxu0 0.0
    %434 = vmatprep.subr.mxu0 0.0
    %435 = vmatpush1.msra.mxu0 0.0
    %436 = vmatprep.subr.mxu0 0.0
    %437 = vmatpush1.msra.mxu0 0.0
    %438 = vmatprep.subr.mxu0 0.0
    %439 = vmatpush1.msra.mxu0 0.0
    %440 = vmatprep.subr.mxu0 0.0
    %441 = vmatpush1.msra.mxu0 0.0
    %442 = vmatprep.subr.mxu0 0.0
    %443 = vmatpush1.msra.mxu0 0.0
    %444 = vmatprep.subr.mxu0 0.0
    %445 = vmatpush1.msra.mxu0 0.0
    %446 = vmatprep.subr.mxu0 0.0
    %447 = vmatpush1.msra.mxu0 0.0
    %448 = vmatprep.subr.mxu0 0.0
    %449 = vmatpush1.msra.mxu0 0.0
    %450 = vmatprep.subr.mxu0 0.0
    %451 = vmatpush1.msra.mxu0 0.0
    %452 = vmatprep.subr.mxu0 0.0
    %453 = vmatpush1.msra.mxu0 0.0
    %454 = vmatprep.subr.mxu0 0.0
    %455 = vmatpush1.msra.mxu0 0.0
    %456 = vmatprep.subr.mxu0 0.0
    %457 = vmatpush1.msra.mxu0 0.0
    %458 = vmatprep.subr.mxu0 0.0
    %459 = vmatpush1.msra.mxu0 0.0
    %460 = vmatprep.mubr.f32.mxu0 0.0
    %461 = vmatmul.mubr.f32.gmra.mrb[0].mxu0 %v102
    %v462 = vpop.f32.mrb[0].mxu0
    %v463 = vadd.f32 %v384, %v462
    %v464 = vpop.f32.mrb[0].mxu0
    %v465 = vadd.f32 %v388, %v464
    %466 = vdwg.mxu0
    %467 = vmatprep.subr.mxu0 0.0
    %468 = vmatpush1.msra.mxu0 %v334
    %469 = vmatprep.subr.mxu0 0.0
    %470 = vmatpush1.msra.mxu0 %v337
    %471 = vmatprep.subr.mxu0 0.0
    %472 = vmatpush1.msra.mxu0 %v340
    %473 = vmatprep.subr.mxu0 0.0
    %474 = vmatpush1.msra.mxu0 %v343
    %475 = vmatprep.subr.mxu0 0.0
    %476 = vmatpush1.msra.mxu0 %v346
    %477 = vmatprep.subr.mxu0 0.0
    %478 = vmatpush1.msra.mxu0 %v349
    %479 = vmatprep.subr.mxu0 0.0
    %480 = vmatpush1.msra.mxu0 %v352
    %481 = vmatprep.subr.mxu0 0.0
    %482 = vmatpush1.msra.mxu0 %v355
    %483 = vmatprep.subr.mxu0 0.0
    %484 = vmatpush1.msra.mxu0 %v358
    %485 = vmatprep.subr.mxu0 0.0
    %486 = vmatpush1.msra.mxu0 %v361
    %487 = vmatprep.subr.mxu0 0.0
    %488 = vmatpush1.msra.mxu0 %v364
    %489 = vmatprep.subr.mxu0 0.0
    %490 = vmatpush1.msra.mxu0 %v367
    %491 = vmatprep.subr.mxu0 0.0
    %492 = vmatpush1.msra.mxu0 %v370
    %493 = vmatprep.subr.mxu0 0.0
    %494 = vmatpush1.msra.mxu0 %v373
    %495 = vmatprep.subr.mxu0 0.0
    %496 = vmatpush1.msra.mxu0 %v376
    %497 = vmatprep.subr.mxu0 0.0
    %498 = vmatpush1.msra.mxu0 %v379
    %499 = vmatprep.subr.mxu0 0.0
    %500 = vmatpush1.msra.mxu0 0.0
    %501 = vmatprep.subr.mxu0 0.0
    %502 = vmatpush1.msra.mxu0 0.0
    %503 = vmatprep.subr.mxu0 0.0
    %504 = vmatpush1.msra.mxu0 0.0
    %505 = vmatprep.subr.mxu0 0.0
    %506 = vmatpush1.msra.mxu0 0.0
    %507 = vmatprep.subr.mxu0 0.0
    %508 = vmatpush1.msra.mxu0 0.0
    %509 = vmatprep.subr.mxu0 0.0
    %510 = vmatpush1.msra.mxu0 0.0
    %511 = vmatprep.subr.mxu0 0.0
    %512 = vmatpush1.msra.mxu0 0.0
    %513 = vmatprep.subr.mxu0 0.0
    %514 = vmatpush1.msra.mxu0 0.0
    %515 = vmatprep.subr.mxu0 0.0
    %516 = vmatpush1.msra.mxu0 0.0
    %517 = vmatprep.subr.mxu0 0.0
    %518 = vmatpush1.msra.mxu0 0.0
    %519 = vmatprep.subr.mxu0 0.0
    %520 = vmatpush1.msra.mxu0 0.0
    %521 = vmatprep.subr.mxu0 0.0
    %522 = vmatpush1.msra.mxu0 0.0
    %523 = vmatprep.subr.mxu0 0.0
    %524 = vmatpush1.msra.mxu0 0.0
    %525 = vmatprep.subr.mxu0 0.0
    %526 = vmatpush1.msra.mxu0 0.0
    %527 = vmatprep.subr.mxu0 0.0
    %528 = vmatpush1.msra.mxu0 0.0
    %529 = vmatprep.subr.mxu0 0.0
    %530 = vmatpush1.msra.mxu0 0.0
    %531 = vmatprep.mubr.f32.mxu0 0.0
    %532 = vmatmul.mubr.f32.gmra.mrb[0].mxu0 %v102
    %v533 = vpop.f32.mrb[0].mxu0
    %v534 = vadd.f32 %v392, %v533
    %v535 = vpop.f32.mrb[0].mxu0
    %536 = vdwg.mxu0
    %v537 = vadd.f32 %v331, %v463
    %v538 = vxor.u32 %v537, 2147483648
    %v539 = vmul.f32 %v538, 1.442695
    %v540 = vpow.pop %v539
    %v541 = vadd.f32 %v540, 1.0
    %v542 = vrcp.pop %v541
    %v543 = vmul.f32 1.0, %v542
    %v545 = vrot.slane %v331, 1
    %v547 = vadd.f32 %v545, %v465
    %v548 = vxor.u32 %v547, 2147483648
    %v549 = vmul.f32 %v548, 1.442695
    %v550 = vpow.pop %v549
    %v551 = vadd.f32 %v550, 1.0
    %v552 = vrcp.pop %v551
    %v553 = vmul.f32 1.0, %v552
    %v554 = vmul.f32 %v543, %v534
    %v555 = vrot.slane %v331, 2
    %v557 = vadd.f32 %v555, %v554
    %v558 = vtanh.pop %v557
    %v559 = vsub.f32 1.0, %v553
    %v560 = vmul.f32 %v559, %v558
    %v561 = vmul.f32 %v553, %v102
    %v562 = vadd.f32 %v560, %v561
    %v563 = vld [vmem:[#allocation10] sm:$0xff]
    %v564 = vld [vmem:[#allocation10 + $0x8] sm:$0xff]
    %v565 = vld [vmem:[#allocation10 + $0x10] sm:$0xff]
    %v566 = vld [vmem:[#allocation10 + $0x18] sm:$0xff]
    %v567 = vld [vmem:[#allocation10 + $0x20] sm:$0xff]
    %v568 = vld [vmem:[#allocation10 + $0x28] sm:$0xff]
    %v569 = vld [vmem:[#allocation10 + $0x30] sm:$0xff]
    %v570 = vld [vmem:[#allocation10 + $0x38] sm:$0xff]
    %v571 = vld [vmem:[#allocation10 + $0x40] sm:$0xff]
    %v572 = vld [vmem:[#allocation10 + $0x48] sm:$0xff]
    %v573 = vld [vmem:[#allocation10 + $0x50] sm:$0xff]
    %v574 = vld [vmem:[#allocation10 + $0x58] sm:$0xff]
    %v575 = vld [vmem:[#allocation10 + $0x60] sm:$0xff]
    %v576 = vld [vmem:[#allocation10 + $0x68] sm:$0xff]
    %v577 = vld [vmem:[#allocation10 + $0x70] sm:$0xff]
    %v578 = vld [vmem:[#allocation10 + $0x78] sm:$0xff]
    %579 = vmatprep.subr.mxu0 0.0
    %580 = vmatpush1.msra.mxu0 %v563
    %581 = vmatprep.subr.mxu0 0.0
    %582 = vmatpush1.msra.mxu0 %v564
    %583 = vmatprep.subr.mxu0 0.0
    %584 = vmatpush1.msra.mxu0 %v565
    %585 = vmatprep.subr.mxu0 0.0
    %586 = vmatpush1.msra.mxu0 %v566
    %587 = vmatprep.subr.mxu0 0.0
    %588 = vmatpush1.msra.mxu0 %v567
    %589 = vmatprep.subr.mxu0 0.0
    %590 = vmatpush1.msra.mxu0 %v568
    %591 = vmatprep.subr.mxu0 0.0
    %592 = vmatpush1.msra.mxu0 %v569
    %593 = vmatprep.subr.mxu0 0.0
    %594 = vmatpush1.msra.mxu0 %v570
    %595 = vmatprep.subr.mxu0 0.0
    %596 = vmatpush1.msra.mxu0 %v571
    %597 = vmatprep.subr.mxu0 0.0
    %598 = vmatpush1.msra.mxu0 %v572
    %599 = vmatprep.subr.mxu0 0.0
    %600 = vmatpush1.msra.mxu0 %v573
    %601 = vmatprep.subr.mxu0 0.0
    %602 = vmatpush1.msra.mxu0 %v574
    %603 = vmatprep.subr.mxu0 0.0
    %604 = vmatpush1.msra.mxu0 %v575
    %605 = vmatprep.subr.mxu0 0.0
    %606 = vmatpush1.msra.mxu0 %v576
    %607 = vmatprep.subr.mxu0 0.0
    %608 = vmatpush1.msra.mxu0 %v577
    %609 = vmatprep.subr.mxu0 0.0
    %610 = vmatpush1.msra.mxu0 %v578
    %611 = vmatprep.subr.mxu0 0.0
    %612 = vmatpush1.msra.mxu0 0.0
    %613 = vmatprep.subr.mxu0 0.0
    %614 = vmatpush1.msra.mxu0 0.0
    %615 = vmatprep.subr.mxu0 0.0
    %616 = vmatpush1.msra.mxu0 0.0
    %617 = vmatprep.subr.mxu0 0.0
    %618 = vmatpush1.msra.mxu0 0.0
    %619 = vmatprep.subr.mxu0 0.0
    %620 = vmatpush1.msra.mxu0 0.0
    %621 = vmatprep.subr.mxu0 0.0
    %622 = vmatpush1.msra.mxu0 0.0
    %623 = vmatprep.subr.mxu0 0.0
    %624 = vmatpush1.msra.mxu0 0.0
    %625 = vmatprep.subr.mxu0 0.0
    %626 = vmatpush1.msra.mxu0 0.0
    %627 = vmatprep.subr.mxu0 0.0
    %628 = vmatpush1.msra.mxu0 0.0
    %629 = vmatprep.subr.mxu0 0.0
    %630 = vmatpush1.msra.mxu0 0.0
    %631 = vmatprep.subr.mxu0 0.0
    %632 = vmatpush1.msra.mxu0 0.0
    %633 = vmatprep.subr.mxu0 0.0
    %634 = vmatpush1.msra.mxu0 0.0
    %635 = vmatprep.subr.mxu0 0.0
    %636 = vmatpush1.msra.mxu0 0.0
    %637 = vmatprep.subr.mxu0 0.0
    %638 = vmatpush1.msra.mxu0 0.0
    %639 = vmatprep.subr.mxu0 0.0
    %640 = vmatpush1.msra.mxu0 0.0
    %641 = vmatprep.subr.mxu0 0.0
    %642 = vmatpush1.msra.mxu0 0.0
    %643 = vmatprep.mubr.f32.mxu0 0.0
    %644 = vmatmul.mubr.f32.gmra.mrb[0].mxu0 %v562
    %v645 = vpop.f32.mrb[0].mxu0
    %v646 = vadd.f32 0.0, %v645
    %v647 = vpop.f32.mrb[0].mxu0
    %648 = vdwg.mxu0
    %v649 = vld [vmem:[#allocation13 + $0x80] sm:$0xff]
    %v650 = vld [vmem:[#allocation13 + $0x88] sm:$0xff]
    %v651 = vld [vmem:[#allocation13 + $0x90] sm:$0xff]
    %v652 = vld [vmem:[#allocation13 + $0x98] sm:$0xff]
    %v653 = vld [vmem:[#allocation13 + $0xa0] sm:$0xff]
    %v654 = vld [vmem:[#allocation13 + $0xa8] sm:$0xff]
    %v655 = vld [vmem:[#allocation13 + $0xb0] sm:$0xff]
    %v656 = vld [vmem:[#allocation13 + $0xb8] sm:$0xff]
    %v657 = vld [vmem:[#allocation13 + $0xc0] sm:$0xff]
    %v658 = vld [vmem:[#allocation13 + $0xc8] sm:$0xff]
    %v659 = vld [vmem:[#allocation13 + $0xd0] sm:$0xff]
    %v660 = vld [vmem:[#allocation13 + $0xd8] sm:$0xff]
    %v661 = vld [vmem:[#allocation13 + $0xe0] sm:$0xff]
    %v662 = vld [vmem:[#allocation13 + $0xe8] sm:$0xff]
    %v663 = vld [vmem:[#allocation13 + $0xf0] sm:$0xff]
    %v664 = vld [vmem:[#allocation13 + $0xf8] sm:$0xff]
    %665 = vmatprep.subr.mxu0 0.0
    %666 = vmatpush1.msra.mxu0 %v649
    %667 = vmatprep.subr.mxu0 0.0
    %668 = vmatpush1.msra.mxu0 %v650
    %669 = vmatprep.subr.mxu0 0.0
    %670 = vmatpush1.msra.mxu0 %v651
    %671 = vmatprep.subr.mxu0 0.0
    %672 = vmatpush1.msra.mxu0 %v652
    %673 = vmatprep.subr.mxu0 0.0
    %674 = vmatpush1.msra.mxu0 %v653
    %675 = vmatprep.subr.mxu0 0.0
    %676 = vmatpush1.msra.mxu0 %v654
    %677 = vmatprep.subr.mxu0 0.0
    %678 = vmatpush1.msra.mxu0 %v655
    %679 = vmatprep.subr.mxu0 0.0
    %680 = vmatpush1.msra.mxu0 %v656
    %681 = vmatprep.subr.mxu0 0.0
    %682 = vmatpush1.msra.mxu0 %v657
    %683 = vmatprep.subr.mxu0 0.0
    %684 = vmatpush1.msra.mxu0 %v658
    %685 = vmatprep.subr.mxu0 0.0
    %686 = vmatpush1.msra.mxu0 %v659
    %687 = vmatprep.subr.mxu0 0.0
    %688 = vmatpush1.msra.mxu0 %v660
    %689 = vmatprep.subr.mxu0 0.0
    %690 = vmatpush1.msra.mxu0 %v661
    %691 = vmatprep.subr.mxu0 0.0
    %692 = vmatpush1.msra.mxu0 %v662
    %693 = vmatprep.subr.mxu0 0.0
    %694 = vmatpush1.msra.mxu0 %v663
    %695 = vmatprep.subr.mxu0 0.0
    %696 = vmatpush1.msra.mxu0 %v664
    %697 = vmatprep.subr.mxu0 0.0
    %698 = vmatpush1.msra.mxu0 0.0
    %699 = vmatprep.subr.mxu0 0.0
    %700 = vmatpush1.msra.mxu0 0.0
    %701 = vmatprep.subr.mxu0 0.0
    %702 = vmatpush1.msra.mxu0 0.0
    %703 = vmatprep.subr.mxu0 0.0
    %704 = vmatpush1.msra.mxu0 0.0
    %705 = vmatprep.subr.mxu0 0.0
    %706 = vmatpush1.msra.mxu0 0.0
    %707 = vmatprep.subr.mxu0 0.0
    %708 = vmatpush1.msra.mxu0 0.0
    %709 = vmatprep.subr.mxu0 0.0
    %710 = vmatpush1.msra.mxu0 0.0
    %711 = vmatprep.subr.mxu0 0.0
    %712 = vmatpush1.msra.mxu0 0.0
    %713 = vmatprep.subr.mxu0 0.0
    %714 = vmatpush1.msra.mxu0 0.0
    %715 = vmatprep.subr.mxu0 0.0
    %716 = vmatpush1.msra.mxu0 0.0
    %717 = vmatprep.subr.mxu0 0.0
    %718 = vmatpush1.msra.mxu0 0.0
    %719 = vmatprep.subr.mxu0 0.0
    %720 = vmatpush1.msra.mxu0 0.0
    %721 = vmatprep.subr.mxu0 0.0
    %722 = vmatpush1.msra.mxu0 0.0
    %723 = vmatprep.subr.mxu0 0.0
    %724 = vmatpush1.msra.mxu0 0.0
    %725 = vmatprep.subr.mxu0 0.0
    %726 = vmatpush1.msra.mxu0 0.0
    %727 = vmatprep.subr.mxu0 0.0
    %728 = vmatpush1.msra.mxu0 0.0
    %729 = vmatprep.mubr.f32.mxu0 0.0
    %730 = vmatmul.mubr.f32.gmra.mrb[0].mxu0 %v646
    %v731 = vpop.f32.mrb[0].mxu0
    %v732 = vadd.f32 0.0, %v731
    %v733 = vpop.f32.mrb[0].mxu0
    %734 = vdwg.mxu0
    %vm735 = vcmp.lt.s32.totalorder %v98, 8
    %v736 = vsel %vm735, %v732, -1e+30
    %vm737 = vcmask 1040384
    %v738 = vsel %vm737, %v736, -inf
    %739 = vmax.xlane.f32.xlu0 %v738
    %v740 = vpop.xlane.xlu0 %739
    %v741 = vsub.f32 %v736, %v740
    %v742 = vmul.f32 %v741, 1.442695
    %v743 = vpow.pop %v742
    %v744 = vsel %vm737, %v743, 0.0
    %745 = vadd.xlane.f32.xlu0 %v744
    %v746 = vpop.xlane.xlu0 %745
    %v747 = vrcp.pop %v746
    %v748 = vmul.f32 %v743, %v747
    %v749 = vld [vmem:[#allocation13] sm:$0xff]
    %v750 = vld [vmem:[#allocation13 + $0x8] sm:$0xff]
    %v751 = vld [vmem:[#allocation13 + $0x10] sm:$0xff]
    %v752 = vld [vmem:[#allocation13 + $0x18] sm:$0xff]
    %v753 = vld [vmem:[#allocation13 + $0x20] sm:$0xff]
    %v754 = vld [vmem:[#allocation13 + $0x28] sm:$0xff]
    %v755 = vld [vmem:[#allocation13 + $0x30] sm:$0xff]
    %v756 = vld [vmem:[#allocation13 + $0x38] sm:$0xff]
    %v757 = vld [vmem:[#allocation13 + $0x40] sm:$0xff]
    %v758 = vld [vmem:[#allocation13 + $0x48] sm:$0xff]
    %v759 = vld [vmem:[#allocation13 + $0x50] sm:$0xff]
    %v760 = vld [vmem:[#allocation13 + $0x58] sm:$0xff]
    %v761 = vld [vmem:[#allocation13 + $0x60] sm:$0xff]
    %v762 = vld [vmem:[#allocation13 + $0x68] sm:$0xff]
    %v763 = vld [vmem:[#allocation13 + $0x70] sm:$0xff]
    %v764 = vld [vmem:[#allocation13 + $0x78] sm:$0xff]
    %765 = vmatprep.subr.mxu0 0.0
    %766 = vmatpush1.msra.mxu0 %v749
    %767 = vmatprep.subr.mxu0 0.0
    %768 = vmatpush1.msra.mxu0 %v750
    %769 = vmatprep.subr.mxu0 0.0
    %770 = vmatpush1.msra.mxu0 %v751
    %771 = vmatprep.subr.mxu0 0.0
    %772 = vmatpush1.msra.mxu0 %v752
    %773 = vmatprep.subr.mxu0 0.0
    %774 = vmatpush1.msra.mxu0 %v753
    %775 = vmatprep.subr.mxu0 0.0
    %776 = vmatpush1.msra.mxu0 %v754
    %777 = vmatprep.subr.mxu0 0.0
    %778 = vmatpush1.msra.mxu0 %v755
    %779 = vmatprep.subr.mxu0 0.0
    %780 = vmatpush1.msra.mxu0 %v756
    %781 = vmatprep.subr.mxu0 0.0
    %782 = vmatpush1.msra.mxu0 %v757
    %783 = vmatprep.subr.mxu0 0.0
    %784 = vmatpush1.msra.mxu0 %v758
    %785 = vmatprep.subr.mxu0 0.0
    %786 = vmatpush1.msra.mxu0 %v759
    %787 = vmatprep.subr.mxu0 0.0
    %788 = vmatpush1.msra.mxu0 %v760
    %789 = vmatprep.subr.mxu0 0.0
    %790 = vmatpush1.msra.mxu0 %v761
    %791 = vmatprep.subr.mxu0 0.0
    %792 = vmatpush1.msra.mxu0 %v762
    %793 = vmatprep.subr.mxu0 0.0
    %794 = vmatpush1.msra.mxu0 %v763
    %795 = vmatprep.subr.mxu0 0.0
    %796 = vmatpush1.msra.mxu0 %v764
    %797 = vmatprep.subr.mxu0 0.0
    %798 = vmatpush1.msra.mxu0 0.0
    %799 = vmatprep.subr.mxu0 0.0
    %800 = vmatpush1.msra.mxu0 0.0
    %801 = vmatprep.subr.mxu0 0.0
    %802 = vmatpush1.msra.mxu0 0.0
    %803 = vmatprep.subr.mxu0 0.0
    %804 = vmatpush1.msra.mxu0 0.0
    %805 = vmatprep.subr.mxu0 0.0
    %806 = vmatpush1.msra.mxu0 0.0
    %807 = vmatprep.subr.mxu0 0.0
    %808 = vmatpush1.msra.mxu0 0.0
    %809 = vmatprep.subr.mxu0 0.0
    %810 = vmatpush1.msra.mxu0 0.0
    %811 = vmatprep.subr.mxu0 0.0
    %812 = vmatpush1.msra.mxu0 0.0
    %813 = vmatprep.subr.mxu0 0.0
    %814 = vmatpush1.msra.mxu0 0.0
    %815 = vmatprep.subr.mxu0 0.0
    %816 = vmatpush1.msra.mxu0 0.0
    %817 = vmatprep.subr.mxu0 0.0
    %818 = vmatpush1.msra.mxu0 0.0
    %819 = vmatprep.subr.mxu0 0.0
    %820 = vmatpush1.msra.mxu0 0.0
    %821 = vmatprep.subr.mxu0 0.0
    %822 = vmatpush1.msra.mxu0 0.0
    %823 = vmatprep.subr.mxu0 0.0
    %824 = vmatpush1.msra.mxu0 0.0
    %825 = vmatprep.subr.mxu0 0.0
    %826 = vmatpush1.msra.mxu0 0.0
    %827 = vmatprep.subr.mxu0 0.0
    %828 = vmatpush1.msra.mxu0 0.0
    %829 = vmatprep.mubr.f32.mxu0 0.0
    %830 = vmatmul.mubr.f32.gmra.mrb[0].mxu0 %v748
    %v831 = vpop.f32.mrb[0].mxu0
    %v832 = vadd.f32 0.0, %v831
    %v833 = vpop.f32.mrb[0].mxu0
    %834 = vdwg.mxu0
    %835 = vst [vmem:[#allocation2] sm:$0x1] %v562
    %836 = vst [vmem:[#allocation2 + $0x8] sm:$0x1] %v832
    %837 = vst [vmem:[#allocation18] sm:$0x1] %v748
    %838 = vst [vmem:[#allocation18 + $0x1] sm:$0x7f] 0.0
    %v839 = vld [vmem:[#allocation2] sm:$0xff]
    %v840 = vld [vmem:[#allocation2 + $0x8] sm:$0xff]
    %v841 = vld [vmem:[#allocation11] sm:$0xff]
    %v842 = vld [vmem:[#allocation11 + $0x8] sm:$0xff]
    %v843 = vld [vmem:[#allocation11 + $0x10] sm:$0xff]
    %v844 = vld [vmem:[#allocation11 + $0x18] sm:$0xff]
    %v845 = vld [vmem:[#allocation11 + $0x20] sm:$0xff]
    %v846 = vld [vmem:[#allocation11 + $0x28] sm:$0xff]
    %v847 = vld [vmem:[#allocation11 + $0x30] sm:$0xff]
    %v848 = vld [vmem:[#allocation11 + $0x38] sm:$0xff]
    %v849 = vld [vmem:[#allocation11 + $0x40] sm:$0xff]
    %v850 = vld [vmem:[#allocation11 + $0x48] sm:$0xff]
    %v851 = vld [vmem:[#allocation11 + $0x50] sm:$0xff]
    %v852 = vld [vmem:[#allocation11 + $0x58] sm:$0xff]
    %v853 = vld [vmem:[#allocation11 + $0x60] sm:$0xff]
    %v854 = vld [vmem:[#allocation11 + $0x68] sm:$0xff]
    %v855 = vld [vmem:[#allocation11 + $0x70] sm:$0xff]
    %v856 = vld [vmem:[#allocation11 + $0x78] sm:$0xff]
    %v857 = vld [vmem:[#allocation11 + $0x80] sm:$0xff]
    %v858 = vld [vmem:[#allocation11 + $0x88] sm:$0xff]
    %v859 = vld [vmem:[#allocation11 + $0x90] sm:$0xff]
    %v860 = vld [vmem:[#allocation11 + $0x98] sm:$0xff]
    %v861 = vld [vmem:[#allocation11 + $0xa0] sm:$0xff]
    %v862 = vld [vmem:[#allocation11 + $0xa8] sm:$0xff]
    %v863 = vld [vmem:[#allocation11 + $0xb0] sm:$0xff]
    %v864 = vld [vmem:[#allocation11 + $0xb8] sm:$0xff]
    %v865 = vld [vmem:[#allocation11 + $0xc0] sm:$0xff]
    %v866 = vld [vmem:[#allocation11 + $0xc8] sm:$0xff]
    %v867 = vld [vmem:[#allocation11 + $0xd0] sm:$0xff]
    %v868 = vld [vmem:[#allocation11 + $0xd8] sm:$0xff]
    %v869 = vld [vmem:[#allocation11 + $0xe0] sm:$0xff]
    %v870 = vld [vmem:[#allocation11 + $0xe8] sm:$0xff]
    %v871 = vld [vmem:[#allocation11 + $0xf0] sm:$0xff]
    %v872 = vld [vmem:[#allocation11 + $0xf8] sm:$0xff]
    %v873 = vld [vmem:[#allocation11 + $0x100] sm:$0x1]
    %v874 = vlaneseq
    %v875 = vshrl.u32 %v874, 7
    %v876 = vsub.s32 0, %v875
    %v877 = vrot.slane %v873, %v876
    %878 = vmatprep.subr.mxu0 0.0
    %879 = vmatpush1.msra.mxu0 %v841
    %880 = vmatprep.subr.mxu0 0.0
    %881 = vmatpush1.msra.mxu0 %v842
    %882 = vmatprep.subr.mxu0 0.0
    %883 = vmatpush1.msra.mxu0 %v843
    %884 = vmatprep.subr.mxu0 0.0
    %885 = vmatpush1.msra.mxu0 %v844
    %886 = vmatprep.subr.mxu0 0.0
    %887 = vmatpush1.msra.mxu0 %v845
    %888 = vmatprep.subr.mxu0 0.0
    %889 = vmatpush1.msra.mxu0 %v846
    %890 = vmatprep.subr.mxu0 0.0
    %891 = vmatpush1.msra.mxu0 %v847
    %892 = vmatprep.subr.mxu0 0.0
    %893 = vmatpush1.msra.mxu0 %v848
    %894 = vmatprep.subr.mxu0 0.0
    %895 = vmatpush1.msra.mxu0 %v849
    %896 = vmatprep.subr.mxu0 0.0
    %897 = vmatpush1.msra.mxu0 %v850
    %898 = vmatprep.subr.mxu0 0.0
    %899 = vmatpush1.msra.mxu0 %v851
    %900 = vmatprep.subr.mxu0 0.0
    %901 = vmatpush1.msra.mxu0 %v852
    %902 = vmatprep.subr.mxu0 0.0
    %903 = vmatpush1.msra.mxu0 %v853
    %904 = vmatprep.subr.mxu0 0.0
    %905 = vmatpush1.msra.mxu0 %v854
    %906 = vmatprep.subr.mxu0 0.0
    %907 = vmatpush1.msra.mxu0 %v855
    %908 = vmatprep.subr.mxu0 0.0
    %909 = vmatpush1.msra.mxu0 %v856
    %910 = vmatprep.subr.mxu0 0.0
    %911 = vmatpush1.msra.mxu0 %v857
    %912 = vmatprep.subr.mxu0 0.0
    %913 = vmatpush1.msra.mxu0 %v858
    %914 = vmatprep.subr.mxu0 0.0
    %915 = vmatpush1.msra.mxu0 %v859
    %916 = vmatprep.subr.mxu0 0.0
    %917 = vmatpush1.msra.mxu0 %v860
    %918 = vmatprep.subr.mxu0 0.0
    %919 = vmatpush1.msra.mxu0 %v861
    %920 = vmatprep.subr.mxu0 0.0
    %921 = vmatpush1.msra.mxu0 %v862
    %922 = vmatprep.subr.mxu0 0.0
    %923 = vmatpush1.msra.mxu0 %v863
    %924 = vmatprep.subr.mxu0 0.0
    %925 = vmatpush1.msra.mxu0 %v864
    %926 = vmatprep.subr.mxu0 0.0
    %927 = vmatpush1.msra.mxu0 %v865
    %928 = vmatprep.subr.mxu0 0.0
    %929 = vmatpush1.msra.mxu0 %v866
    %930 = vmatprep.subr.mxu0 0.0
    %931 = vmatpush1.msra.mxu0 %v867
    %932 = vmatprep.subr.mxu0 0.0
    %933 = vmatpush1.msra.mxu0 %v868
    %934 = vmatprep.subr.mxu0 0.0
    %935 = vmatpush1.msra.mxu0 %v869
    %936 = vmatprep.subr.mxu0 0.0
    %937 = vmatpush1.msra.mxu0 %v870
    %938 = vmatprep.subr.mxu0 0.0
    %939 = vmatpush1.msra.mxu0 %v871
    %940 = vmatprep.subr.mxu0 0.0
    %941 = vmatpush1.msra.mxu0 %v872
    %942 = vmatprep.mubr.f32.mxu0 %v840
    %943 = vmatmul.mubr.f32.gmra.mrb[0].mxu0 %v839
    %v944 = vpop.f32.mrb[0].mxu0
    %v945 = vadd.f32 %v877, %v944
    %v946 = vpop.f32.mrb[0].mxu0
    %947 = vdwg.mxu0
    %948 = vmax.xlane.f32.xlu0 %v945
    %v949 = vpop.xlane.xlu0 %948
    %v950 = vsub.f32 %v945, %v949
    %v951 = vmul.f32 %v950, 1.442695
    %v952 = vpow.pop %v951
    %953 = vadd.xlane.f32.xlu0 %v952
    %v954 = vpop.xlane.xlu0 %953
    %v955 = vlog2.pop %v954
    %v956 = vmul.f32 %v955, 0.6931472
    %v957 = vsub.f32 %v950, %v956
    %958 = vst [vmem:[#allocation14] sm:$0xff] %v957
    %959 = vst [vmem:[#allocation15] sm:$0xff] %v839
    %960 = vst [vmem:[#allocation17] sm:$0xff] %v840
    // Predicated region
    $region42: #{tpu_custom_call.1} parent=1 // pred_check
      _
    $region43: #{tpu_custom_call.1} parent=1 // pred_check_branch
      %962 = sbr.rel (0) target = $region45
    $region44: #{tpu_custom_call.1} parent=1 // pred_region
      %s964 = ssub.s32 128, 128
      %965 = vsyncadd [#allocation7], %s964
      %s967 = sshll.u32 [#allocation14], 4
      %s968 = int_to_ptr.vmem [resolvable:$true] %s967
      %970 = dma.vmem_to_hbm [thread:$0]  %s968, 128, %s6, [#allocation7]
    $region45: #{tpu_custom_call.1} parent=1 // pred_fallthru
      _
    // Predicated region
    $region46: #{tpu_custom_call.1} parent=1 // pred_check
      _
    $region47: #{tpu_custom_call.1} parent=1 // pred_check_branch
      %972 = sbr.rel (0) target = $region49
    $region48: #{tpu_custom_call.1} parent=1 // pred_region
      %s974 = ssub.s32 128, 128
      %975 = vsyncadd [#allocation16], %s974
      %s977 = sshll.u32 [#allocation15], 4
      %s978 = int_to_ptr.vmem [resolvable:$true] %s977
      %980 = dma.vmem_to_hbm [thread:$0]  %s978, 128, %s7, [#allocation16]
    $region49: #{tpu_custom_call.1} parent=1 // pred_fallthru
      _
    // Predicated region
    $region50: #{tpu_custom_call.1} parent=1 // pred_check
      _
    $region51: #{tpu_custom_call.1} parent=1 // pred_check_branch
      %982 = sbr.rel (0) target = $region53
    $region52: #{tpu_custom_call.1} parent=1 // pred_region
      %s984 = ssub.s32 128, 128
      %985 = vsyncadd [#allocation16], %s984
      %s987 = sshll.u32 [#allocation17], 4
      %s988 = int_to_ptr.vmem [resolvable:$true] %s987
      %990 = dma.vmem_to_hbm [thread:$0]  %s988, 128, %s8, [#allocation16]
    $region53: #{tpu_custom_call.1} parent=1 // pred_fallthru
      _
    // Predicated region
    $region54: #{tpu_custom_call.1} parent=1 // pred_check
      _
    $region55: #{tpu_custom_call.1} parent=1 // pred_check_branch
      %992 = sbr.rel (0) target = $region57
    $region56: #{tpu_custom_call.1} parent=1 // pred_region
      %s994 = ssub.s32 128, 128
      %995 = vsyncadd [#allocation19], %s994
      %s997 = sshll.u32 [#allocation18], 4
      %s998 = int_to_ptr.vmem [resolvable:$true] %s997
      %1000 = dma.vmem_to_hbm [thread:$0]  %s998, 128, %s9, [#allocation19]
    $region57: #{tpu_custom_call.1} parent=1 // pred_fallthru
      _
    // Predicated region
    $region58: #{tpu_custom_call.1} parent=1 // pred_check
      _
    $region59: #{tpu_custom_call.1} parent=1 // pred_check_branch
      %1002 = sbr.rel (0) target = $region61
    $region60: #{tpu_custom_call.1} parent=1 // pred_region
      %1003 = dma.done [#allocation7], 128
    $region61: #{tpu_custom_call.1} parent=1 // pred_fallthru
      _
    // Predicated region
    $region62: #{tpu_custom_call.1} parent=1 // pred_check
      _
    $region63: #{tpu_custom_call.1} parent=1 // pred_check_branch
      %1005 = sbr.rel (0) target = $region65
    $region64: #{tpu_custom_call.1} parent=1 // pred_region
      %1006 = dma.done [#allocation16], 128
    $region65: #{tpu_custom_call.1} parent=1 // pred_fallthru
      _
    // Predicated region
    $region66: #{tpu_custom_call.1} parent=1 // pred_check
      _
    $region67: #{tpu_custom_call.1} parent=1 // pred_check_branch
      %1008 = sbr.rel (0) target = $region69
    $region68: #{tpu_custom_call.1} parent=1 // pred_region
      %1009 = dma.done [#allocation16], 128
    $region69: #{tpu_custom_call.1} parent=1 // pred_fallthru
      _
    // Predicated region
    $region70: #{tpu_custom_call.1} parent=1 // pred_check
      _
    $region71: #{tpu_custom_call.1} parent=1 // pred_check_branch
      %1011 = sbr.rel (0) target = $region73
    $region72: #{tpu_custom_call.1} parent=1 // pred_region
      %1012 = dma.done [#allocation19], 128
    $region73: #{tpu_custom_call.1} parent=1 // pred_fallthru
      _
    %1013 = vsyncpa [#allocation6], 1
    %1014 = vsyncpa [#allocation9], 1
    %1015 = vsyncpa [#allocation12], 1
    %1016 = vsyncpa [#allocation7], 1
    %1017 = vsyncpa [#allocation16], 1
    %1018 = vsyncpa [#allocation19], 1

</llo_original>
